<compile_context>
chip_gen: v7x
topology: tpu7x:2x2x1
jax: 0.10.0
libtpu: 0.0.40
codegen_flags: <defaults>
</compile_context>

<pallas_src>
import jax
import jax.numpy as jnp
import numpy as np
from jax.experimental import pallas as pl
from jax.experimental.pallas import tpu as pltpu

# Small, module-consistent sizes
UPSTREAM_DIM = 32     # upstream_dim
INPUT_DIM = 32        # modelrc['input_dim']
NUM_CLASSES = 16      # train_dataset.speaker_num
C_PAD = 128           # classifier head padded to a lane-dense 128 columns
TT = 512              # time tile (sublane dim of the feature block)
NEG_BIG = -1.0e9      # bias for padded (non-existent) class columns
MASK_VAL = -100000.0  # additive attention-mask value, as in expert.py


def sap_pool_kernel(
    lens_ref,     # (B,)           i32  SMEM (scalar prefetch: valid lengths)
    feat_ref,     # (1, TT, D_up)  bf16 VMEM  per-(sample, time-tile) block
    wc_ref,       # (D_up, D_in)   bf16 VMEM  resident (connector weight)
    bc_ref,       # (1, D_in)      f32  VMEM  resident (connector bias)
    wsap_ref,     # (1, D_in)      f32  VMEM  resident (SAP attention weight)
    bsap_ref,     # (1, 1)         f32  SMEM  (SAP attention bias, scalar)
    utter_ref,    # (1, 1, D_in)   f32  out: pooled utterance embedding
    m_scr,        # (1, 1)    f32 scratch: running max of attention logits
    l_scr,        # (1, 1)    f32 scratch: running sum of exp
    acc_scr,      # (1, D_in) f32 scratch: running weighted sum of tanh(connector(x))
):
    bi = pl.program_id(0)          # sample index   ("parallel")
    kt = pl.program_id(1)          # time-tile index ("arbitrary", reduction)
    tt = feat_ref.shape[1]
    n_valid = lens_ref[bi]         # i32 scalar from SMEM

    @pl.when(kt == 0)
    def _init():
        m_scr[...] = jnp.full(m_scr.shape, -jnp.inf, m_scr.dtype)
        l_scr[...] = jnp.zeros(l_scr.shape, l_scr.dtype)
        acc_scr[...] = jnp.zeros(acc_scr.shape, acc_scr.dtype)

    # Skip fully-padded trailing tiles of short utterances (DMA + step overhead only).
    @pl.when(kt * tt < n_valid)
    def _tile():
        # connector: single 2-D (TT, D_up) @ (D_up, D_in) MXU matmul, bf16 in / f32 acc.
        feat = feat_ref[0]                                               # (TT, D_up) bf16
        x = jnp.dot(feat, wc_ref[...], preferred_element_type=jnp.float32)
        x = x + bc_ref[...]                                              # (TT, D_in) f32

        # TODO(synk): eval(config['module']) inner encoder of Model is external to
        # expert.py; it is treated as identity here.

        h = jnp.tanh(x)                                                  # (TT, D_in) f32

        # SAP attention logits, lane-dense (time on lanes): contract D_in on the MXU.
        att = jax.lax.dot_general(
            wsap_ref[...], h,
            dimension_numbers=(((1,), (1,)), ((), ())),
            preferred_element_type=jnp.float32)                          # (1, TT)
        att = att + bsap_ref[0, 0]

        # additive mask built in-kernel from the prefetched length (matches (1-mask)*-1e5).
        t_idx = jax.lax.broadcasted_iota(jnp.int32, att.shape, 1) + kt * tt
        att = att + jnp.where(t_idx < n_valid,
                              jnp.float32(0.0), jnp.float32(MASK_VAL))

        # online softmax over time tiles (flash-style running (m, l, acc) state), lane-dense.
        m_prev = m_scr[...]                                              # (1, 1)
        m_new = jnp.maximum(m_prev, jnp.max(att, axis=-1, keepdims=True))
        alpha = jnp.exp(m_prev - m_new)                                  # (1, 1)
        p = jnp.exp(att - m_new)                                         # (1, TT)
        l_scr[...] = alpha * l_scr[...] + jnp.sum(p, axis=-1, keepdims=True)
        # pooling weighted-sum as an MXU contraction over time: (1,TT)@(TT,D_in) -> (1,D_in)
        acc_scr[...] = alpha * acc_scr[...] + jnp.dot(
            p, h, preferred_element_type=jnp.float32)
        m_scr[...] = m_new

    @pl.when(kt == pl.num_programs(1) - 1)
    def _finalize():
        # guard against a (pathological) zero-length utterance: l would be 0.
        denom = jnp.maximum(l_scr[...], jnp.float32(1e-30))
        utter_ref[0] = acc_scr[...] / denom                              # (1, D_in)


def classifier_ce_kernel(
    utter_ref,    # (B, D_in)   f32 VMEM  pooled utterance embeddings
    wcls_ref,     # (D_in, C_PAD) f32 VMEM classifier weight (padded columns = 0)
    bcls_ref,     # (1, C_PAD)  f32 VMEM  classifier bias (padded columns = -1e9)
    labels_ref,   # (B, 1)      i32 VMEM  per-sample labels
    logits_ref,   # (B, C_PAD)  f32 out
    nll_ref,      # (B, 1)      f32 out   per-sample cross-entropy
):
    # One batched M=B matmul (instead of B separate M=1 matmuls in a finalize branch).
    logits = jnp.dot(utter_ref[...], wcls_ref[...],
                     preferred_element_type=jnp.float32) + bcls_ref[...]   # (B, C_PAD)
    logits_ref[...] = logits

    # cross entropy per sample (padded class columns carry -1e9 bias -> exp == 0)
    lm = jnp.max(logits, axis=-1, keepdims=True)
    lse = jnp.log(jnp.sum(jnp.exp(logits - lm), axis=-1, keepdims=True)) + lm
    col = jax.lax.broadcasted_iota(jnp.int32, logits.shape, 1)
    onehot = (col == labels_ref[...]).astype(jnp.float32)                  # (B, C_PAD)
    tgt = jnp.sum(logits * onehot, axis=-1, keepdims=True)
    nll_ref[...] = lse - tgt                                               # (B, 1)


def pad_batch(features_list, tt):
    """pad_sequence(batch_first=True); time is padded to a multiple of the time tile.
    Returns padded features and per-sample valid lengths (the mask is built in-kernel)."""
    b = len(features_list)
    d = int(features_list[0].shape[1])
    t_max = max(int(f.shape[0]) for f in features_list)
    t_pad = ((t_max + tt - 1) // tt) * tt
    feats = np.zeros((b, t_pad, d), np.float32)
    lengths = np.zeros((b,), np.int32)
    for i, f in enumerate(features_list):
        n = int(f.shape[0])
        feats[i, :n] = np.asarray(f, np.float32)
        lengths[i] = n
    return jnp.asarray(feats), jnp.asarray(lengths)


def downstream_expert_forward(features_list, labels, params, tt=TT):
    """Mirrors DownstreamExpert.forward: returns (loss, logits, predicted_classid, acc)."""
    feats, lengths = pad_batch(features_list, tt)
    b, t_pad, d_up = feats.shape
    d_in = params['bc'].shape[1]
    c_pad = params['bcls'].shape[1]
    num_classes = params['num_classes']
    assert num_classes <= c_pad

    feats_bf16 = feats.astype(jnp.bfloat16)          # halve HBM->VMEM DMA bytes
    labels = jnp.asarray(labels, jnp.int32).reshape(b)

    grid = (b, t_pad // tt)
    grid_spec = pltpu.PrefetchScalarGridSpec(
        num_scalar_prefetch=1,                       # lengths -> SMEM
        grid=grid,
        in_specs=[
            pl.BlockSpec((1, tt, d_up), lambda bi, kt, lens: (bi, kt, 0)),  # features (tiled)
            pl.BlockSpec((d_up, d_in),  lambda bi, kt, lens: (0, 0)),       # wc   (VMEM-resident)
            pl.BlockSpec((1, d_in),     lambda bi, kt, lens: (0, 0)),       # bc
            pl.BlockSpec((1, d_in),     lambda bi, kt, lens: (0, 0)),       # wsap
            pl.BlockSpec(memory_space=pltpu.MemorySpace.SMEM),              # bsap scalar
        ],
        out_specs=pl.BlockSpec((1, 1, d_in), lambda bi, kt, lens: (bi, 0, 0)),
        scratch_shapes=[
            pltpu.VMEM((1, 1), jnp.float32),     # running max
            pltpu.VMEM((1, 1), jnp.float32),     # running denom
            pltpu.VMEM((1, d_in), jnp.float32),  # running weighted sum
        ],
    )

    utter3 = pl.pallas_call(
        sap_pool_kernel,
        grid_spec=grid_spec,
        out_shape=jax.ShapeDtypeStruct((b, 1, d_in), jnp.float32),
        compiler_params=pltpu.CompilerParams(
            dimension_semantics=("parallel", "arbitrary"),   # batch across v7x cores
            vmem_limit_bytes=32 * 1024 * 1024,
        ),
    )(lengths, feats_bf16, params['wc'], params['bc'], params['wsap'], params['bsap'])

    utter = utter3[:, 0, :]                          # (B, D_in)
    labels2 = labels.reshape(b, 1)

    logits_pad, nll = pl.pallas_call(
        classifier_ce_kernel,
        out_shape=(jax.ShapeDtypeStruct((b, c_pad), jnp.float32),
                   jax.ShapeDtypeStruct((b, 1), jnp.float32)),
    )(utter, params['wcls'], params['bcls'], labels2)

    logits = logits_pad[:, :num_classes]             # slice off lane padding
    loss = jnp.mean(nll[:, 0])                       # mean CE over batch (glue)
    predicted_classid = jnp.argmax(logits, axis=-1)
    acc = (predicted_classid == labels).astype(jnp.float32)
    return loss, logits, predicted_classid, acc


def init_params(key, upstream_dim=UPSTREAM_DIM, input_dim=INPUT_DIM,
                num_classes=NUM_CLASSES, c_pad=C_PAD):
    """Deterministic synthetic parameters (PyTorch-Linear-like uniform scale).
    Classifier is padded to c_pad lane-dense columns; padded columns get zero
    weight and a -1e9 bias so they never win softmax / argmax."""
    ks = jax.random.split(key, 6)

    def u(k, shape, fan_in):
        return jax.random.uniform(k, shape, jnp.float32, -1.0, 1.0) / np.sqrt(fan_in)

    wc = u(ks[0], (upstream_dim, input_dim), upstream_dim)
    bc = u(ks[1], (1, input_dim), upstream_dim)
    wsap = u(ks[2], (1, input_dim), input_dim)
    bsap = u(ks[3], (1, 1), input_dim)
    wcls = u(ks[4], (input_dim, num_classes), input_dim)
    bcls = u(ks[5], (1, num_classes), input_dim)

    wcls_p = jnp.zeros((input_dim, c_pad), jnp.float32).at[:, :num_classes].set(wcls)
    bcls_p = jnp.full((1, c_pad), NEG_BIG, jnp.float32).at[:, :num_classes].set(bcls)

    return dict(
        wc=wc.astype(jnp.bfloat16), bc=bc, wsap=wsap, bsap=bsap,
        wcls=wcls_p, bcls=bcls_p,               # wcls kept f32 (only ~16 KiB resident)
        num_classes=num_classes,
    )


def reference_forward(feats_f32, lengths, labels, params):
    """Pure-JAX reference of the same math (same bf16-quantized wc / features)."""
    b, t, _ = feats_f32.shape
    valid = (jnp.arange(t)[None, :] < lengths[:, None]).astype(jnp.float32)
    att_mask = (1.0 - valid) * MASK_VAL
    wc = params['wc'].astype(jnp.float32)
    x = jnp.einsum('btd,de->bte', feats_f32, wc) + params['bc']
    h = jnp.tanh(x)
    att = jnp.sum(h * params['wsap'][None], axis=-1) + params['bsap'][0, 0] + att_mask
    w = jax.nn.softmax(att, axis=-1)
    utter = jnp.einsum('bt,btd->bd', w, h)
    logits_full = utter @ params['wcls'] + params['bcls']
    lse = jax.nn.logsumexp(logits_full, axis=-1)
    tgt = jnp.take_along_axis(logits_full, labels[:, None], axis=1)[:, 0]
    loss = jnp.mean(lse - tgt)
    return logits_full[:, :params['num_classes']], loss


if __name__ == "__main__":
    key = jax.random.PRNGKey(0)
    kp, kf1, kf2, kl = jax.random.split(key, 4)
    params = init_params(kp)

    # variable-length upstream features (like [wav1_feats, wav2_feats, ...]);
    # sample 0 spans two full time tiles, sample 1 is shorter than one tile so the
    # online-softmax accumulation, the partial in-kernel mask, and the padded-tile
    # skip guard are all exercised.
    lengths = [2 * TT, TT - 45]
    features = [jax.random.normal(k, (n, UPSTREAM_DIM), jnp.float32)
                for k, n in zip((kf1, kf2), lengths)]
    labels = jax.random.randint(kl, (len(features),), 0, NUM_CLASSES)

    loss, logits, pred, acc = downstream_expert_forward(features, labels, params)
    jax.block_until_ready((loss, logits, pred, acc))

    # numerical sanity check against a pure-JAX reference
    feats, lens = pad_batch(features, TT)
    feats_q = feats.astype(jnp.bfloat16).astype(jnp.float32)   # same bf16 feature quantization
    ref_logits, ref_loss = reference_forward(feats_q, lens,
                                             jnp.asarray(labels, jnp.int32), params)
    assert np.allclose(np.asarray(logits), np.asarray(ref_logits), atol=1e-3, rtol=1e-3)
    assert np.allclose(float(loss), float(ref_loss), atol=1e-3, rtol=1e-3)

    print("KERNEL_OK")
</pallas_src>

<mosaic_0001>
module attributes {stable_mosaic.version = 11 : i64} {
  func.func @sap_pool_kernel(%arg0: i32, %arg1: i32, %arg2: memref<2xi32, #tpu.memory_space<smem>>, %arg3: memref<1x512x32xbf16, #tpu.memory_space<vmem>>, %arg4: memref<32x32xbf16, #tpu.memory_space<vmem>>, %arg5: memref<1x32xf32, #tpu.memory_space<vmem>>, %arg6: memref<1x32xf32, #tpu.memory_space<vmem>>, %arg7: memref<1x1xf32, #tpu.memory_space<smem>>, %arg8: memref<1x1x32xf32, #tpu.memory_space<vmem>>, %arg9: memref<1x1xf32, #tpu.memory_space<vmem>>, %arg10: memref<1x1xf32, #tpu.memory_space<vmem>>, %arg11: memref<1x32xf32, #tpu.memory_space<vmem>>) attributes {dimension_semantics = [#tpu.dimension_semantics<parallel>, #tpu.dimension_semantics<arbitrary>], iteration_bounds = array<i64: 2, 2>, scalar_prefetch = 1 : i64, scratch_operands = 3 : i64, tpu.core_type = #tpu.core_type<tc>, window_params = [{transform_indices = @transform_0, window_bounds = array<i64: 1, 512, 32>}, {pipeline_mode = #tpu.pipeline_mode<synchronous>, transform_indices = @transform_1, window_bounds = array<i64: 32, 32>}, {pipeline_mode = #tpu.pipeline_mode<synchronous>, transform_indices = @transform_2, window_bounds = array<i64: 1, 32>}, {pipeline_mode = #tpu.pipeline_mode<synchronous>, transform_indices = @transform_3, window_bounds = array<i64: 1, 32>}, {transform_indices = @transform_4, window_bounds = array<i64: 1, 1>}, {transform_indices = @transform_5, window_bounds = array<i64: 1, 1, 32>}]} {
    %0 = arith.index_cast %arg0 : i32 to index
    %1 = memref.load %arg2[%0] : memref<2xi32, #tpu.memory_space<smem>>
    %c0_i32 = arith.constant 0 : i32
    %2 = arith.cmpi eq, %arg1, %c0_i32 : i32
    %3 = arith.extui %2 : i1 to i32
    %c0_i32_0 = arith.constant 0 : i32
    %4 = arith.cmpi ne, %3, %c0_i32_0 : i32
    scf.if %4 {
      %cst = arith.constant 0xFF800000 : f32
      %12 = vector.broadcast %cst : f32 to vector<1x1xf32>
      %c0 = arith.constant 0 : index
      %c0_3 = arith.constant 0 : index
      %13 = vector.load %arg9[%c0, %c0_3] : memref<1x1xf32, #tpu.memory_space<vmem>>, vector<1x1xf32>
      tpu.vector_store %arg9[%c0, %c0_3], %12 {strides = array<i32>} : memref<1x1xf32, #tpu.memory_space<vmem>>, vector<1x1xf32>,
      %cst_4 = arith.constant 0.000000e+00 : f32
      %14 = vector.broadcast %cst_4 : f32 to vector<1x1xf32>
      %c0_5 = arith.constant 0 : index
      %c0_6 = arith.constant 0 : index
      %15 = vector.load %arg10[%c0_5, %c0_6] : memref<1x1xf32, #tpu.memory_space<vmem>>, vector<1x1xf32>
      tpu.vector_store %arg10[%c0_5, %c0_6], %14 {strides = array<i32>} : memref<1x1xf32, #tpu.memory_space<vmem>>, vector<1x1xf32>,
      %cst_7 = arith.constant 0.000000e+00 : f32
      %16 = vector.broadcast %cst_7 : f32 to vector<1x32xf32>
      %c0_8 = arith.constant 0 : index
      %c0_9 = arith.constant 0 : index
      %17 = vector.load %arg11[%c0_8, %c0_9] : memref<1x32xf32, #tpu.memory_space<vmem>>, vector<1x32xf32>
      tpu.vector_store %arg11[%c0_8, %c0_9], %16 {strides = array<i32>} : memref<1x32xf32, #tpu.memory_space<vmem>>, vector<1x32xf32>,
    } else {
    }
    %c512_i32 = arith.constant 512 : i32
    %5 = arith.muli %arg1, %c512_i32 : i32
    %6 = arith.cmpi slt, %5, %1 : i32
    %7 = arith.extui %6 : i1 to i32
    %c0_i32_1 = arith.constant 0 : i32
    %8 = arith.cmpi ne, %7, %c0_i32_1 : i32
    scf.if %8 {
      %c0 = arith.constant 0 : index
      %c0_3 = arith.constant 0 : index
      %c0_4 = arith.constant 0 : index
      %12 = vector.load %arg3[%c0, %c0_3, %c0_4] : memref<1x512x32xbf16, #tpu.memory_space<vmem>>, vector<1x512x32xbf16>
      %13 = vector.shape_cast %12 : vector<1x512x32xbf16> to vector<512x32xbf16>
      %c0_5 = arith.constant 0 : index
      %c0_6 = arith.constant 0 : index
      %14 = vector.load %arg4[%c0_5, %c0_6] : memref<32x32xbf16, #tpu.memory_space<vmem>>, vector<32x32xbf16>
      %cst = arith.constant dense<0.000000e+00> : vector<512x32xf32>
      %15 = tpu.matmul %13, %14, %cst {dimension_numbers = #tpu.dot_dimension_numbers<[1], [0], [0], [1], [0, 0, 1, 1], [], []>} : vector<512x32xbf16>, vector<32x32xbf16>, vector<512x32xf32> -> vector<512x32xf32>
      %c0_7 = arith.constant 0 : index
      %c0_8 = arith.constant 0 : index
      %16 = vector.load %arg5[%c0_7, %c0_8] : memref<1x32xf32, #tpu.memory_space<vmem>>, vector<1x32xf32>
      %17 = vector.broadcast %16 : vector<1x32xf32> to vector<512x32xf32>
      %18 = arith.addf %15, %17 : vector<512x32xf32>
      %19 = math.tanh %18 : vector<512x32xf32>
      %c0_9 = arith.constant 0 : index
      %c0_10 = arith.constant 0 : index
      %20 = vector.load %arg6[%c0_9, %c0_10] : memref<1x32xf32, #tpu.memory_space<vmem>>, vector<1x32xf32>
      %cst_11 = arith.constant dense<0.000000e+00> : vector<1x512xf32>
      %21 = tpu.matmul %20, %19, %cst_11 {dimension_numbers = #tpu.dot_dimension_numbers<[1], [1], [0], [0], [0, 0, 1, 0], [], []>} : vector<1x32xf32>, vector<512x32xf32>, vector<1x512xf32> -> vector<1x512xf32>
      %c0_12 = arith.constant 0 : index
      %c0_13 = arith.constant 0 : index
      %22 = memref.load %arg7[%c0_12, %c0_13] : memref<1x1xf32, #tpu.memory_space<smem>>
      %23 = vector.broadcast %22 : f32 to vector<1x512xf32>
      %24 = arith.addf %21, %23 : vector<1x512xf32>
      %25 = tpu.iota {dimensions = array<i32: 1>} : vector<1x512xi32>
      %c512_i32_14 = arith.constant 512 : i32
      %26 = arith.muli %arg1, %c512_i32_14 : i32
      %27 = vector.broadcast %26 : i32 to vector<1x512xi32>
      %28 = arith.addi %25, %27 : vector<1x512xi32>
      %29 = vector.broadcast %1 : i32 to vector<1x512xi32>
      %30 = arith.cmpi slt, %28, %29 : vector<1x512xi32>
      %cst_15 = arith.constant 0.000000e+00 : f32
      %cst_16 = arith.constant -1.000000e+05 : f32
      %31 = vector.broadcast %cst_15 : f32 to vector<1x512xf32>
      %32 = vector.broadcast %cst_16 : f32 to vector<1x512xf32>
      %33 = arith.select %30, %31, %32 : vector<1x512xi1>, vector<1x512xf32>
      %34 = arith.addf %24, %33 : vector<1x512xf32>
      %c0_17 = arith.constant 0 : index
      %c0_18 = arith.constant 0 : index
      %35 = vector.load %arg9[%c0_17, %c0_18] : memref<1x1xf32, #tpu.memory_space<vmem>>, vector<1x1xf32>
      %cst_19 = arith.constant dense<0xFF800000> : vector<1xf32>
      %36 = vector.multi_reduction <maximumf>, %34, %cst_19 [1] : vector<1x512xf32> to vector<1xf32>
      %37 = vector.shape_cast %36 : vector<1xf32> to vector<1x1xf32>
      %38 = arith.maximumf %35, %37 : vector<1x1xf32>
      %39 = arith.subf %35, %38 : vector<1x1xf32>
      %40 = math.exp %39 : vector<1x1xf32>
      %41 = vector.broadcast %38 : vector<1x1xf32> to vector<1x512xf32>
      %42 = arith.subf %34, %41 : vector<1x512xf32>
      %43 = math.exp %42 : vector<1x512xf32>
      %c0_20 = arith.constant 0 : index
      %c0_21 = arith.constant 0 : index
      %44 = vector.load %arg10[%c0_20, %c0_21] : memref<1x1xf32, #tpu.memory_space<vmem>>, vector<1x1xf32>
      %45 = arith.mulf %40, %44 : vector<1x1xf32>
      %cst_22 = arith.constant dense<0.000000e+00> : vector<1xf32>
      %46 = vector.multi_reduction <add>, %43, %cst_22 [1] : vector<1x512xf32> to vector<1xf32>
      %47 = vector.shape_cast %46 : vector<1xf32> to vector<1x1xf32>
      %48 = arith.addf %45, %47 : vector<1x1xf32>
      %c0_23 = arith.constant 0 : index
      %c0_24 = arith.constant 0 : index
      %49 = vector.load %arg10[%c0_23, %c0_24] : memref<1x1xf32, #tpu.memory_space<vmem>>, vector<1x1xf32>
      tpu.vector_store %arg10[%c0_23, %c0_24], %48 {strides = array<i32>} : memref<1x1xf32, #tpu.memory_space<vmem>>, vector<1x1xf32>,
      %c0_25 = arith.constant 0 : index
      %c0_26 = arith.constant 0 : index
      %50 = vector.load %arg11[%c0_25, %c0_26] : memref<1x32xf32, #tpu.memory_space<vmem>>, vector<1x32xf32>
      %51 = vector.broadcast %40 : vector<1x1xf32> to vector<1x32xf32>
      %52 = arith.mulf %51, %50 : vector<1x32xf32>
      %cst_27 = arith.constant dense<0.000000e+00> : vector<1x32xf32>
      %53 = tpu.matmul %43, %19, %cst_27 {dimension_numbers = #tpu.dot_dimension_numbers<[1], [0], [0], [1], [0, 0, 1, 1], [], []>} : vector<1x512xf32>, vector<512x32xf32>, vector<1x32xf32> -> vector<1x32xf32>
      %54 = arith.addf %52, %53 : vector<1x32xf32>
      %c0_28 = arith.constant 0 : index
      %c0_29 = arith.constant 0 : index
      %55 = vector.load %arg11[%c0_28, %c0_29] : memref<1x32xf32, #tpu.memory_space<vmem>>, vector<1x32xf32>
      tpu.vector_store %arg11[%c0_28, %c0_29], %54 {strides = array<i32>} : memref<1x32xf32, #tpu.memory_space<vmem>>, vector<1x32xf32>,
      %c0_30 = arith.constant 0 : index
      %c0_31 = arith.constant 0 : index
      %56 = vector.load %arg9[%c0_30, %c0_31] : memref<1x1xf32, #tpu.memory_space<vmem>>, vector<1x1xf32>
      tpu.vector_store %arg9[%c0_30, %c0_31], %38 {strides = array<i32>} : memref<1x1xf32, #tpu.memory_space<vmem>>, vector<1x1xf32>,
    } else {
    }
    %c1_i32 = arith.constant 1 : i32
    %9 = arith.cmpi eq, %arg1, %c1_i32 : i32
    %10 = arith.extui %9 : i1 to i32
    %c0_i32_2 = arith.constant 0 : i32
    %11 = arith.cmpi ne, %10, %c0_i32_2 : i32
    scf.if %11 {
      %c0 = arith.constant 0 : index
      %c0_3 = arith.constant 0 : index
      %12 = vector.load %arg10[%c0, %c0_3] : memref<1x1xf32, #tpu.memory_space<vmem>>, vector<1x1xf32>
      %cst = arith.constant 1.000000e-30 : f32
      %13 = vector.broadcast %cst : f32 to vector<1x1xf32>
      %14 = arith.maximumf %12, %13 : vector<1x1xf32>
      %c0_4 = arith.constant 0 : index
      %c0_5 = arith.constant 0 : index
      %15 = vector.load %arg11[%c0_4, %c0_5] : memref<1x32xf32, #tpu.memory_space<vmem>>, vector<1x32xf32>
      %16 = vector.broadcast %14 : vector<1x1xf32> to vector<1x32xf32>
      %17 = arith.divf %15, %16 : vector<1x32xf32>
      %c0_6 = arith.constant 0 : index
      %c0_7 = arith.constant 0 : index
      %c0_8 = arith.constant 0 : index
      %18 = vector.load %arg8[%c0_6, %c0_7, %c0_8] : memref<1x1x32xf32, #tpu.memory_space<vmem>>, vector<1x1x32xf32>
      %19 = vector.shape_cast %18 : vector<1x1x32xf32> to vector<1x32xf32>
      %20 = vector.shape_cast %17 : vector<1x32xf32> to vector<1x1x32xf32>
      tpu.vector_store %arg8[%c0_6, %c0_7, %c0_8], %20 {strides = array<i32>} : memref<1x1x32xf32, #tpu.memory_space<vmem>>, vector<1x1x32xf32>,
    } else {
    }
    return
  }
  func.func @transform_0(%arg0: i32, %arg1: i32, %arg2: memref<2xi32, #tpu.memory_space<smem>>) -> (i32, i32, i32) {
    %c0_i32 = arith.constant 0 : i32
    %c0_i32_0 = arith.constant 0 : i32
    return %arg0, %arg1, %c0_i32 : i32, i32, i32
  }
  func.func @transform_1(%arg0: i32, %arg1: i32, %arg2: memref<2xi32, #tpu.memory_space<smem>>) -> (i32, i32) {
    %c0_i32 = arith.constant 0 : i32
    %c0_i32_0 = arith.constant 0 : i32
    %c0_i32_1 = arith.constant 0 : i32
    return %c0_i32, %c0_i32_0 : i32, i32
  }
  func.func @transform_2(%arg0: i32, %arg1: i32, %arg2: memref<2xi32, #tpu.memory_space<smem>>) -> (i32, i32) {
    %c0_i32 = arith.constant 0 : i32
    %c0_i32_0 = arith.constant 0 : i32
    %c0_i32_1 = arith.constant 0 : i32
    return %c0_i32, %c0_i32_0 : i32, i32
  }
  func.func @transform_3(%arg0: i32, %arg1: i32, %arg2: memref<2xi32, #tpu.memory_space<smem>>) -> (i32, i32) {
    %c0_i32 = arith.constant 0 : i32
    %c0_i32_0 = arith.constant 0 : i32
    %c0_i32_1 = arith.constant 0 : i32
    return %c0_i32, %c0_i32_0 : i32, i32
  }
  func.func @transform_4(%arg0: i32, %arg1: i32, %arg2: memref<2xi32, #tpu.memory_space<smem>>) -> (i32, i32) {
    %c0_i32 = arith.constant 0 : i32
    %c0_i32_0 = arith.constant 0 : i32
    %c0_i32_1 = arith.constant 0 : i32
    return %c0_i32, %c0_i32_0 : i32, i32
  }
  func.func @transform_5(%arg0: i32, %arg1: i32, %arg2: memref<2xi32, #tpu.memory_space<smem>>) -> (i32, i32, i32) {
    %c0_i32 = arith.constant 0 : i32
    %c0_i32_0 = arith.constant 0 : i32
    %c0_i32_1 = arith.constant 0 : i32
    return %arg0, %c0_i32, %c0_i32_0 : i32, i32, i32
  }
}

</mosaic_0001>

<llo_original>
// kernel: tpu_custom_call.1
$region0: #{tpu_custom_call.1}
  #allocation0 [shape = 'u32[]', space=smem, size = 0x4, offset = 0x4, fixed_abs, tag = 'smem constant byte address 0x4 - core index']
  #allocation1 [shape = 'u32[144,128]{1,0:T(1,128)}', space=vmem, size = 0x12000, scoped, tag = 'internal scratch']
  #allocation2 [shape = 'f32[1,1]{1,0:T(1,128)}', space=vmem, size = 0x200, scoped, tag = 'scratch operand']
  #allocation3 [shape = 'f32[1,1]{1,0:T(1,128)}', space=vmem, size = 0x200, scoped, tag = 'scratch operand']
  #allocation4 [shape = 'f32[1,32]{1,0:T(1,128)}', space=vmem, size = 0x200, scoped, tag = 'scratch operand']
  #allocation5 [shape = 's32[1]{0}', space=sflag, size = 0x4, scoped, tag = 'scoped memory for tpu_custom_call.1']
  #allocation6 [shape = 'u8[512]{0}', space=smem, size = 0x200, scoped, tag = 'prefetched SMEM operand 0']
  #allocation7 [shape = 'f32[1,1]{1,0:T(1,128)S(6)}', space=smem, size = 0x200, scoped, tag = 'scoped memory for tpu_custom_call.1']
  %s0 = inlined_call_operand.vmem [shape: s32[2], index: 0, kind: input, shape index: {}]
  %s1 = inlined_call_operand.vmem [shape: bf16[2,1024,32], index: 1, kind: input, shape index: {}]
  %s2 = inlined_call_operand.vmem [shape: bf16[32,32], index: 2, kind: input, shape index: {}]
  %s3 = inlined_call_operand.vmem [shape: f32[1,32], index: 3, kind: input, shape index: {}]
  %s4 = inlined_call_operand.vmem [shape: f32[1,32], index: 4, kind: input, shape index: {}]
  %s5 = inlined_call_operand.<no memory space> [shape: f32[1,1], index: 5, kind: input, shape index: {}]
  %s6 = inlined_call_operand.hbm [shape: f32[2,1,32], index: 6, kind: output, shape index: {}]
  %s7 = sld [smem:[#allocation0]]
  $region65: #{tpu_custom_call.1} parent=0
    _
  %s9 = ssub.s32 1, %s7
  %s10 = scalar_select 0, %s9, %s7
  %s11 = sshll.u32 %s0, 4
  %s12 = int_to_ptr.vmem [resolvable:$true] %s11
  %14 = dma.vmem_to_smem %s12, 16, [#allocation6], [#allocation5]
  %15 = sst [smem:[#allocation7]] %s5
  %16 = dma.done [#allocation5], 16
  %17 = sfence
  $region1: #{tpu_custom_call.1} parent=0
    #allocation8 [shape = 'u8[1024]{0}', space=vmem, size = 0x400, scoped, tag = 'output window, operand 0']
    #allocation9 [shape = 's32[2]{0}', space=sflag, size = 0x8, scoped, tag = 'scoped memory for tpu_custom_call.1']
    %18 = vsyncpa [#allocation9], 0
    %s19 = scalar_lea.sflag [#allocation9], 1
    %20 = vsyncpa %s19, 0
    loop: start=0, step=1, limit=6
    $region2: #{tpu_custom_call.1} parent=1 // loop_pre_header
      _
    $region3: #{tpu_custom_call.1} parent=1 // loop_header
      %s22 = sphi 0, %s26
      %p23 = scmp.ge.s32.totalorder %s22, 6
      %s29 = sphi 0, %s41
      %s30 = sphi 0, %s37
      %s31 = sphi 0, %s29
      %s32 = sphi 0, %s30
      %s33 = sphi 0, %s31
      %s34 = sphi 0, %s32
      %s46 = sphi 0, %s48
      %s49 = sphi 0, %s46
      %s50 = sphi 0, %s49
      %s66 = sphi 0, %s50
      %s70 = sphi 0, %s70
      %s72 = sphi 0, %s70
      %s73 = sphi 0, %s72
      %s87 = sphi 0, %s73
      %s91 = sphi 0, %s91
      %s93 = sphi 0, %s91
      %s94 = sphi 0, %s93
      %s108 = sphi 0, %s94
      %s112 = sphi 0, %s112
      %s114 = sphi 0, %s112
      %s115 = sphi 0, %s114
      %s129 = sphi 0, %s115
      %s133 = sphi 0, %s133
      %s135 = sphi 0, %s133
      %s136 = sphi 0, %s135
      %s150 = sphi 0, %s136
      %s156 = sphi 0, %s158
      %s159 = sphi 0, %s156
      %s160 = sphi 0, %s159
      %s176 = sphi 0, %s160
    $region4: #{tpu_custom_call.1} parent=1 // loop_header_branch
      %25 = sbr.rel (%p23) target = $region8
    $region5: #{tpu_custom_call.1} parent=1 // loop_body
      %s27 = ssub.s32 %s22, 1
      %s28 = ssub.s32 %s22, 2
      %s35 = sadd.s32 1, %s30
      %p36 = scmp.ge.s32.totalorder %s35, 2
      %s37 = scalar_select %p36, 0, %s35
      %s38 = sadd.s32 1, %s29
      %s39 = scalar_select %p36, %s38, %s29
      %p40 = scmp.ge.s32.totalorder %s39, 2
      %s41 = scalar_select %p40, 0, %s39
      %s42 = ssub.s32 %s29, %s41
      %s43 = ssub.s32 %s30, %s37
      %s44 = sor.u32 %s42, %s43
      %p45 = scmp.eq.s32.totalorder %s44, 0
      %s47 = sadd.s32 %s46, 1
      %s48 = scalar_select %p45, %s46, %s47
      %p51 = pneg %p45
      %p52 = scmp.eq.s32.totalorder %s22, 3
      %p53 = por %p51, %p52
      %p54 = scmp.ne.s32.totalorder %s46, %s49
      %p55 = scmp.eq.s32.totalorder %s22, 0
      %p56 = por %p54, %p55
      %p57 = scmp.ne.s32.totalorder %s46, %s49
      %p58 = scmp.eq.s32.totalorder %s27, 3
      %p59 = por %p57, %p58
      %p60 = scmp.ne.s32.totalorder %s49, %s50
      %p61 = scmp.eq.s32.totalorder %s27, 0
      %p62 = por %p60, %p61
      %p63 = scmp.ne.s32.totalorder %s49, %s50
      %p64 = scmp.eq.s32.totalorder %s28, 3
      %p65 = por %p63, %p64
      %p67 = scmp.ne.s32.totalorder %s50, %s66
      %p68 = scmp.eq.s32.totalorder %s28, 0
      %p69 = por %p67, %p68
      %s71 = sadd.s32 %s70, 1
      %p74 = scmp.eq.s32.totalorder %s22, 3
      %p75 = scmp.ne.s32.totalorder %s70, %s72
      %p76 = scmp.eq.s32.totalorder %s22, 0
      %p77 = por %p75, %p76
      %p78 = scmp.ne.s32.totalorder %s70, %s72
      %p79 = scmp.eq.s32.totalorder %s27, 3
      %p80 = por %p78, %p79
      %p81 = scmp.ne.s32.totalorder %s72, %s73
      %p82 = scmp.eq.s32.totalorder %s27, 0
      %p83 = por %p81, %p82
      %p84 = scmp.ne.s32.totalorder %s72, %s73
      %p85 = scmp.eq.s32.totalorder %s28, 3
      %p86 = por %p84, %p85
      %p88 = scmp.ne.s32.totalorder %s73, %s87
      %p89 = scmp.eq.s32.totalorder %s28, 0
      %p90 = por %p88, %p89
      %s92 = sadd.s32 %s91, 1
      %p95 = scmp.eq.s32.totalorder %s22, 3
      %p96 = scmp.ne.s32.totalorder %s91, %s93
      %p97 = scmp.eq.s32.totalorder %s22, 0
      %p98 = por %p96, %p97
      %p99 = scmp.ne.s32.totalorder %s91, %s93
      %p100 = scmp.eq.s32.totalorder %s27, 3
      %p101 = por %p99, %p100
      %p102 = scmp.ne.s32.totalorder %s93, %s94
      %p103 = scmp.eq.s32.totalorder %s27, 0
      %p104 = por %p102, %p103
      %p105 = scmp.ne.s32.totalorder %s93, %s94
      %p106 = scmp.eq.s32.totalorder %s28, 3
      %p107 = por %p105, %p106
      %p109 = scmp.ne.s32.totalorder %s94, %s108
      %p110 = scmp.eq.s32.totalorder %s28, 0
      %p111 = por %p109, %p110
      %s113 = sadd.s32 %s112, 1
      %p116 = scmp.eq.s32.totalorder %s22, 3
      %p117 = scmp.ne.s32.totalorder %s112, %s114
      %p118 = scmp.eq.s32.totalorder %s22, 0
      %p119 = por %p117, %p118
      %p120 = scmp.ne.s32.totalorder %s112, %s114
      %p121 = scmp.eq.s32.totalorder %s27, 3
      %p122 = por %p120, %p121
      %p123 = scmp.ne.s32.totalorder %s114, %s115
      %p124 = scmp.eq.s32.totalorder %s27, 0
      %p125 = por %p123, %p124
      %p126 = scmp.ne.s32.totalorder %s114, %s115
      %p127 = scmp.eq.s32.totalorder %s28, 3
      %p128 = por %p126, %p127
      %p130 = scmp.ne.s32.totalorder %s115, %s129
      %p131 = scmp.eq.s32.totalorder %s28, 0
      %p132 = por %p130, %p131
      %s134 = sadd.s32 %s133, 1
      %p137 = scmp.eq.s32.totalorder %s22, 3
      %p138 = scmp.ne.s32.totalorder %s133, %s135
      %p139 = scmp.eq.s32.totalorder %s22, 0
      %p140 = por %p138, %p139
      %p141 = scmp.ne.s32.totalorder %s133, %s135
      %p142 = scmp.eq.s32.totalorder %s27, 3
      %p143 = por %p141, %p142
      %p144 = scmp.ne.s32.totalorder %s135, %s136
      %p145 = scmp.eq.s32.totalorder %s27, 0
      %p146 = por %p144, %p145
      %p147 = scmp.ne.s32.totalorder %s135, %s136
      %p148 = scmp.eq.s32.totalorder %s28, 3
      %p149 = por %p147, %p148
      %p151 = scmp.ne.s32.totalorder %s136, %s150
      %p152 = scmp.eq.s32.totalorder %s28, 0
      %p153 = por %p151, %p152
      %s154 = ssub.s32 %s29, %s41
      %p155 = scmp.eq.s32.totalorder %s154, 0
      %s157 = sadd.s32 %s156, 1
      %s158 = scalar_select %p155, %s156, %s157
      %p161 = pneg %p155
      %p162 = scmp.eq.s32.totalorder %s22, 3
      %p163 = por %p161, %p162
      %p164 = scmp.ne.s32.totalorder %s156, %s159
      %p165 = scmp.eq.s32.totalorder %s22, 0
      %p166 = por %p164, %p165
      %p167 = scmp.ne.s32.totalorder %s156, %s159
      %p168 = scmp.eq.s32.totalorder %s27, 3
      %p169 = por %p167, %p168
      %p170 = scmp.ne.s32.totalorder %s159, %s160
      %p171 = scmp.eq.s32.totalorder %s27, 0
      %p172 = por %p170, %p171
      %p173 = scmp.ne.s32.totalorder %s159, %s160
      %p174 = scmp.eq.s32.totalorder %s28, 3
      %p175 = por %p173, %p174
      %p177 = scmp.ne.s32.totalorder %s160, %s176
      %p178 = scmp.eq.s32.totalorder %s28, 0
      %p179 = por %p177, %p178
      %p180 = scmp.le.s32.totalorder 1, %s22
      %p181 = scmp.lt.s32.totalorder %s22, 5
      %p182 = pnand %p180, %p181
      %p183 = pneg %p182
      // Predicated region
      $region9: #{tpu_custom_call.1} parent=5 // pred_check
        _
      $region10: #{tpu_custom_call.1} parent=5 // pred_check_branch
        %185 = sbr.rel (%p182) target = $region12
      $region11: #{tpu_custom_call.1} parent=5 // pred_region
        %s186 = ssub.s32 %s22, 1
        // Predicated region
        $region13: #{tpu_custom_call.1} parent=11 // pred_check
          %p187 = pneg %p83
        $region14: #{tpu_custom_call.1} parent=11 // pred_check_branch
          %189 = sbr.rel (%p187) target = $region16
        $region15: #{tpu_custom_call.1} parent=11 // pred_region
          _
        $region16: #{tpu_custom_call.1} parent=11 // pred_fallthru
          _
        // Predicated region
        $region17: #{tpu_custom_call.1} parent=11 // pred_check
          %p190 = pneg %p104
        $region18: #{tpu_custom_call.1} parent=11 // pred_check_branch
          %192 = sbr.rel (%p190) target = $region20
        $region19: #{tpu_custom_call.1} parent=11 // pred_region
          _
        $region20: #{tpu_custom_call.1} parent=11 // pred_fallthru
          _
        // Predicated region
        $region21: #{tpu_custom_call.1} parent=11 // pred_check
          %p193 = pneg %p125
        $region22: #{tpu_custom_call.1} parent=11 // pred_check_branch
          %195 = sbr.rel (%p193) target = $region24
        $region23: #{tpu_custom_call.1} parent=11 // pred_region
          _
        $region24: #{tpu_custom_call.1} parent=11 // pred_fallthru
          _
        // Predicated region
        $region25: #{tpu_custom_call.1} parent=11 // pred_check
          %p196 = pneg %p146
        $region26: #{tpu_custom_call.1} parent=11 // pred_check_branch
          %198 = sbr.rel (%p196) target = $region28
        $region27: #{tpu_custom_call.1} parent=11 // pred_region
          _
        $region28: #{tpu_custom_call.1} parent=11 // pred_fallthru
          _
      $region12: #{tpu_custom_call.1} parent=5 // pred_fallthru
        _
      %p199 = scmp.lt.s32.totalorder %s22, 4
      // Predicated region
      $region29: #{tpu_custom_call.1} parent=5 // pred_check
        %p200 = pneg %p199
      $region30: #{tpu_custom_call.1} parent=5 // pred_check_branch
        %202 = sbr.rel (%p200) target = $region32
      $region31: #{tpu_custom_call.1} parent=5 // pred_region
        // Predicated region
        $region33: #{tpu_custom_call.1} parent=31 // pred_check
          %p203 = pneg %p56
        $region34: #{tpu_custom_call.1} parent=31 // pred_check_branch
          %205 = sbr.rel (%p203) target = $region36
        $region35: #{tpu_custom_call.1} parent=31 // pred_region
          %s206 = smul.u32 64, %s30
          %p207 = scmp.lt.s32.totalorder %s29, 1
          %s208 = scalar_select %p207, %s29, 1
          %p209 = scmp.lt.s32.totalorder %s206, 127
          %s210 = scalar_select %p209, %s206, 127
          %s211 = smul.addr %s208, 128
          %s212 = sadd.s32 %s210, %s211
          %s213 = smul.addr %s212, 4
          %s214 = scalar_lea.vmem %s1, %s213
          %s215 = smul.u32 64, %s30
        $region36: #{tpu_custom_call.1} parent=31 // pred_fallthru
          _
      $region32: #{tpu_custom_call.1} parent=5 // pred_fallthru
        _
      %p216 = scmp.le.s32.totalorder 1, %s22
      %p217 = scmp.lt.s32.totalorder %s22, 5
      %p218 = pnand %p216, %p217
      %p219 = pneg %p218
      // Predicated region
      $region37: #{tpu_custom_call.1} parent=5 // pred_check
        _
      $region38: #{tpu_custom_call.1} parent=5 // pred_check_branch
        %221 = sbr.rel (%p218) target = $region40
      $region39: #{tpu_custom_call.1} parent=5 // pred_region
        %s222 = ssub.s32 %s22, 1
        %s223 = smul.u32 64, %s32
        %p224 = scmp.lt.s32.totalorder %s31, 1
        %s225 = scalar_select %p224, %s31, 1
        %p226 = scmp.lt.s32.totalorder %s223, 127
        %s227 = scalar_select %p226, %s223, 127
        %s228 = smul.addr %s225, 128
        %s229 = sadd.s32 %s227, %s228
        %s230 = smul.addr %s229, 4
        %s231 = scalar_lea.vmem %s1, %s230
        %p232 = pneg %p62
        %p233 = pneg %p59
        %p234 = pneg %p83
        %p235 = pneg %p80
        %p236 = pneg %p104
        %p237 = pneg %p101
        %p238 = pneg %p125
        %p239 = pneg %p122
        %p240 = pneg %p146
        %p241 = pneg %p143
        %p242 = pneg %p172
        %p243 = pneg %p169
        %s244 = sand.u32 %s159, 1
        %s245 = scalar_lea.sflag [#allocation9], %s244
        %s246 = sand.u32 %s159, 1
        %s247 = scalar_lea.vmem [#allocation8], %s246
        %s248 = smul.u32 64, %s32
        %p249 = scmp.lt.s32.totalorder %s31, 1
        %s250 = scalar_select %p249, %s31, 1
        %p251 = scmp.lt.s32.totalorder %s248, 127
        %s252 = scalar_select %p251, %s248, 127
        %s253 = smul.addr %s250, 128
        %s254 = sadd.s32 %s252, %s253
        %s255 = smul.addr %s254, 4
        %s256 = scalar_lea.vmem %s1, %s255
        %s257 = smul.u32 64, %s32
        %s259 = sld [smem:[#allocation6 + %s31]]
        %p260 = scmp.eq.s32.totalorder %s32, 0
        // Predicated region
        $region41: #{tpu_custom_call.1} parent=39 // pred_check
          %p261 = pneg %p260
        $region42: #{tpu_custom_call.1} parent=39 // pred_check_branch
          %263 = sbr.rel (%p261) target = $region44
        $region43: #{tpu_custom_call.1} parent=39 // pred_region
          %vm264 = vcmask 0
          %265 = vst.msk [vmem:[#allocation2] sm:$0x1] %vm264, -inf
          %266 = vst.msk [vmem:[#allocation3] sm:$0x1] %vm264, 0.0
          %vm267 = vcmask 253952
          %268 = vst.msk [vmem:[#allocation4] sm:$0x1] %vm267, 0.0
        $region44: #{tpu_custom_call.1} parent=39 // pred_fallthru
          _
        %s269 = smul.u32 %s32, 512
        %p270 = scmp.lt.s32.totalorder %s269, %s259
        // Predicated region
        $region45: #{tpu_custom_call.1} parent=39 // pred_check
          %p271 = pneg %p270
        $region46: #{tpu_custom_call.1} parent=39 // pred_check_branch
          %273 = sbr.rel (%p271) target = $region48
        $region47: #{tpu_custom_call.1} parent=39 // pred_region
          %v274 = vld [vmem:[%s256] sm:$0xf]
          %v275 = vld [vmem:[%s256 + $0x4] sm:$0xf]
          %v276 = vld [vmem:[%s256 + $0x8] sm:$0xf]
          %v277 = vld [vmem:[%s256 + $0xc] sm:$0xf]
          %v278 = vld [vmem:[%s256 + $0x10] sm:$0xf]
          %v279 = vld [vmem:[%s256 + $0x14] sm:$0xf]
          %v280 = vld [vmem:[%s256 + $0x18] sm:$0xf]
          %v281 = vld [vmem:[%s256 + $0x1c] sm:$0xf]
          %v282 = vld [vmem:[%s256 + $0x20] sm:$0xf]
          %v283 = vld [vmem:[%s256 + $0x24] sm:$0xf]
          %v284 = vld [vmem:[%s256 + $0x28] sm:$0xf]
          %v285 = vld [vmem:[%s256 + $0x2c] sm:$0xf]
          %v286 = vld [vmem:[%s256 + $0x30] sm:$0xf]
          %v287 = vld [vmem:[%s256 + $0x34] sm:$0xf]
          %v288 = vld [vmem:[%s256 + $0x38] sm:$0xf]
          %v289 = vld [vmem:[%s256 + $0x3c] sm:$0xf]
          %v290 = vld [vmem:[%s256 + $0x40] sm:$0xf]
          %v291 = vld [vmem:[%s256 + $0x44] sm:$0xf]
          %v292 = vld [vmem:[%s256 + $0x48] sm:$0xf]
          %v293 = vld [vmem:[%s256 + $0x4c] sm:$0xf]
          %v294 = vld [vmem:[%s256 + $0x50] sm:$0xf]
          %v295 = vld [vmem:[%s256 + $0x54] sm:$0xf]
          %v296 = vld [vmem:[%s256 + $0x58] sm:$0xf]
          %v297 = vld [vmem:[%s256 + $0x5c] sm:$0xf]
          %v298 = vld [vmem:[%s256 + $0x60] sm:$0xf]
          %v299 = vld [vmem:[%s256 + $0x64] sm:$0xf]
          %v300 = vld [vmem:[%s256 + $0x68] sm:$0xf]
          %v301 = vld [vmem:[%s256 + $0x6c] sm:$0xf]
          %v302 = vld [vmem:[%s256 + $0x70] sm:$0xf]
          %v303 = vld [vmem:[%s256 + $0x74] sm:$0xf]
          %v304 = vld [vmem:[%s256 + $0x78] sm:$0xf]
          %v305 = vld [vmem:[%s256 + $0x7c] sm:$0xf]
          %v306 = vld [vmem:[%s256 + $0x80] sm:$0xf]
          %v307 = vld [vmem:[%s256 + $0x84] sm:$0xf]
          %v308 = vld [vmem:[%s256 + $0x88] sm:$0xf]
          %v309 = vld [vmem:[%s256 + $0x8c] sm:$0xf]
          %v310 = vld [vmem:[%s256 + $0x90] sm:$0xf]
          %v311 = vld [vmem:[%s256 + $0x94] sm:$0xf]
          %v312 = vld [vmem:[%s256 + $0x98] sm:$0xf]
          %v313 = vld [vmem:[%s256 + $0x9c] sm:$0xf]
          %v314 = vld [vmem:[%s256 + $0xa0] sm:$0xf]
          %v315 = vld [vmem:[%s256 + $0xa4] sm:$0xf]
          %v316 = vld [vmem:[%s256 + $0xa8] sm:$0xf]
          %v317 = vld [vmem:[%s256 + $0xac] sm:$0xf]
          %v318 = vld [vmem:[%s256 + $0xb0] sm:$0xf]
          %v319 = vld [vmem:[%s256 + $0xb4] sm:$0xf]
          %v320 = vld [vmem:[%s256 + $0xb8] sm:$0xf]
          %v321 = vld [vmem:[%s256 + $0xbc] sm:$0xf]
          %v322 = vld [vmem:[%s256 + $0xc0] sm:$0xf]
          %v323 = vld [vmem:[%s256 + $0xc4] sm:$0xf]
          %v324 = vld [vmem:[%s256 + $0xc8] sm:$0xf]
          %v325 = vld [vmem:[%s256 + $0xcc] sm:$0xf]
          %v326 = vld [vmem:[%s256 + $0xd0] sm:$0xf]
          %v327 = vld [vmem:[%s256 + $0xd4] sm:$0xf]
          %v328 = vld [vmem:[%s256 + $0xd8] sm:$0xf]
          %v329 = vld [vmem:[%s256 + $0xdc] sm:$0xf]
          %v330 = vld [vmem:[%s256 + $0xe0] sm:$0xf]
          %v331 = vld [vmem:[%s256 + $0xe4] sm:$0xf]
          %v332 = vld [vmem:[%s256 + $0xe8] sm:$0xf]
          %v333 = vld [vmem:[%s256 + $0xec] sm:$0xf]
          %v334 = vld [vmem:[%s256 + $0xf0] sm:$0xf]
          %v335 = vld [vmem:[%s256 + $0xf4] sm:$0xf]
          %v336 = vld [vmem:[%s256 + $0xf8] sm:$0xf]
          %v337 = vld [vmem:[%s256 + $0xfc] sm:$0xf]
          %v338 = vld [vmem:[%s2] sm:$0xf]
          %v339 = vld [vmem:[%s2 + $0x4] sm:$0xf]
          %v340 = vld [vmem:[%s2 + $0x8] sm:$0xf]
          %v341 = vld [vmem:[%s2 + $0xc] sm:$0xf]
          %v342 = vld [vmem:[%s3] sm:$0x1]
          %v344 = vlaneseq
          %v345 = vshrl.u32 %v344, 7
          %v346 = vsub.s32 0, %v345
          %v347 = vrot.slane %v342, %v346
          %v413 = vunpack.c.l.b16 %v274
          %v414 = vunpack.c.l.b16 %v275
          %v415 = vunpack.c.l.b16 %v276
          %v416 = vunpack.c.l.b16 %v277
          %v417 = vunpack.c.l.b16 %v278
          %v418 = vunpack.c.l.b16 %v279
          %v419 = vunpack.c.l.b16 %v280
          %v420 = vunpack.c.l.b16 %v281
          %v421 = vunpack.c.l.b16 %v282
          %v422 = vunpack.c.l.b16 %v283
          %v423 = vunpack.c.l.b16 %v284
          %v424 = vunpack.c.l.b16 %v285
          %v425 = vunpack.c.l.b16 %v286
          %v426 = vunpack.c.l.b16 %v287
          %v427 = vunpack.c.l.b16 %v288
          %v428 = vunpack.c.l.b16 %v289
          %v429 = vunpack.c.l.b16 %v290
          %v430 = vunpack.c.l.b16 %v291
          %v431 = vunpack.c.l.b16 %v292
          %v432 = vunpack.c.l.b16 %v293
          %v433 = vunpack.c.l.b16 %v294
          %v434 = vunpack.c.l.b16 %v295
          %v435 = vunpack.c.l.b16 %v296
          %v436 = vunpack.c.l.b16 %v297
          %v437 = vunpack.c.l.b16 %v298
          %v438 = vunpack.c.l.b16 %v299
          %v439 = vunpack.c.l.b16 %v300
          %v440 = vunpack.c.l.b16 %v301
          %v441 = vunpack.c.l.b16 %v302
          %v442 = vunpack.c.l.b16 %v303
          %v443 = vunpack.c.l.b16 %v304
          %v444 = vunpack.c.l.b16 %v305
          %v445 = vunpack.c.l.b16 %v306
          %v446 = vunpack.c.l.b16 %v307
          %v447 = vunpack.c.l.b16 %v308
          %v448 = vunpack.c.l.b16 %v309
          %v449 = vunpack.c.l.b16 %v310
          %v450 = vunpack.c.l.b16 %v311
          %v451 = vunpack.c.l.b16 %v312
          %v452 = vunpack.c.l.b16 %v313
          %v453 = vunpack.c.l.b16 %v314
          %v454 = vunpack.c.l.b16 %v315
          %v455 = vunpack.c.l.b16 %v316
          %v456 = vunpack.c.l.b16 %v317
          %v457 = vunpack.c.l.b16 %v318
          %v458 = vunpack.c.l.b16 %v319
          %v459 = vunpack.c.l.b16 %v320
          %v460 = vunpack.c.l.b16 %v321
          %v461 = vunpack.c.l.b16 %v322
          %v462 = vunpack.c.l.b16 %v323
          %v463 = vunpack.c.l.b16 %v324
          %v464 = vunpack.c.l.b16 %v325
          %v465 = vunpack.c.l.b16 %v326
          %v466 = vunpack.c.l.b16 %v327
          %v467 = vunpack.c.l.b16 %v328
          %v468 = vunpack.c.l.b16 %v329
          %v469 = vunpack.c.l.b16 %v330
          %v470 = vunpack.c.l.b16 %v331
          %v471 = vunpack.c.l.b16 %v332
          %v472 = vunpack.c.l.b16 %v333
          %v473 = vunpack.c.l.b16 %v334
          %v474 = vunpack.c.l.b16 %v335
          %v475 = vunpack.c.l.b16 %v336
          %v476 = vunpack.c.l.b16 %v337
          %v477 = vpack.c.b16 %v414, %v413
          %v478 = vpack.c.b16 %v416, %v415
          %v479 = vpack.c.b16 %v418, %v417
          %v480 = vpack.c.b16 %v420, %v419
          %v481 = vpack.c.b16 %v422, %v421
          %v482 = vpack.c.b16 %v424, %v423
          %v483 = vpack.c.b16 %v426, %v425
          %v484 = vpack.c.b16 %v428, %v427
          %v485 = vpack.c.b16 %v430, %v429
          %v486 = vpack.c.b16 %v432, %v431
          %v487 = vpack.c.b16 %v434, %v433
          %v488 = vpack.c.b16 %v436, %v435
          %v489 = vpack.c.b16 %v438, %v437
          %v490 = vpack.c.b16 %v440, %v439
          %v491 = vpack.c.b16 %v442, %v441
          %v492 = vpack.c.b16 %v444, %v443
          %v493 = vpack.c.b16 %v446, %v445
          %v494 = vpack.c.b16 %v448, %v447
          %v495 = vpack.c.b16 %v450, %v449
          %v496 = vpack.c.b16 %v452, %v451
          %v497 = vpack.c.b16 %v454, %v453
          %v498 = vpack.c.b16 %v456, %v455
          %v499 = vpack.c.b16 %v458, %v457
          %v500 = vpack.c.b16 %v460, %v459
          %v501 = vpack.c.b16 %v462, %v461
          %v502 = vpack.c.b16 %v464, %v463
          %v503 = vpack.c.b16 %v466, %v465
          %v504 = vpack.c.b16 %v468, %v467
          %v505 = vpack.c.b16 %v470, %v469
          %v506 = vpack.c.b16 %v472, %v471
          %v507 = vpack.c.b16 %v474, %v473
          %v508 = vpack.c.b16 %v476, %v475
          %v513 = vunpack.c.l.b16 %v338
          %v514 = vunpack.c.l.b16 %v339
          %v515 = vunpack.c.l.b16 %v340
          %v516 = vunpack.c.l.b16 %v341
          %v517 = vpack.c.b16 %v514, %v513
          %v518 = vpack.c.b16 %v516, %v515
          %vm521 = vcmask 261120
          %v523 = vsel %vm521, %v477, 0
          %v526 = vsel %vm521, %v478, 0
          %v529 = vsel %vm521, %v479, 0
          %v532 = vsel %vm521, %v480, 0
          %v535 = vsel %vm521, %v481, 0
          %v538 = vsel %vm521, %v482, 0
          %v541 = vsel %vm521, %v483, 0
          %v544 = vsel %vm521, %v484, 0
          %v547 = vsel %vm521, %v485, 0
          %v550 = vsel %vm521, %v486, 0
          %v553 = vsel %vm521, %v487, 0
          %v556 = vsel %vm521, %v488, 0
          %v559 = vsel %vm521, %v489, 0
          %v562 = vsel %vm521, %v490, 0
          %v565 = vsel %vm521, %v491, 0
          %v568 = vsel %vm521, %v492, 0
          %v571 = vsel %vm521, %v493, 0
          %v574 = vsel %vm521, %v494, 0
          %v577 = vsel %vm521, %v495, 0
          %v580 = vsel %vm521, %v496, 0
          %v583 = vsel %vm521, %v497, 0
          %v586 = vsel %vm521, %v498, 0
          %v589 = vsel %vm521, %v499, 0
          %v592 = vsel %vm521, %v500, 0
          %v595 = vsel %vm521, %v501, 0
          %v598 = vsel %vm521, %v502, 0
          %v601 = vsel %vm521, %v503, 0
          %v604 = vsel %vm521, %v504, 0
          %v607 = vsel %vm521, %v505, 0
          %v610 = vsel %vm521, %v506, 0
          %v613 = vsel %vm521, %v507, 0
          %v616 = vsel %vm521, %v508, 0
          %618 = vmatprep.subr.bf16.mxu0 0
          %619 = vmatpush1.bf16.msra.mxu0 %v517
          %620 = vmatprep.subr.bf16.mxu0 0
          %621 = vmatpush1.bf16.msra.mxu0 %v518
          %622 = vmatprep.subr.bf16.mxu0 0
          %623 = vmatpush1.bf16.msra.mxu0 0
          %624 = vmatprep.subr.bf16.mxu0 0
          %625 = vmatpush1.bf16.msra.mxu0 0
          %626 = vmatprep.subr.bf16.mxu0 0
          %627 = vmatpush1.bf16.msra.mxu0 0
          %628 = vmatprep.subr.bf16.mxu0 0
          %629 = vmatpush1.bf16.msra.mxu0 0
          %630 = vmatprep.subr.bf16.mxu0 0
          %631 = vmatpush1.bf16.msra.mxu0 0
          %632 = vmatprep.subr.bf16.mxu0 0
          %633 = vmatpush1.bf16.msra.mxu0 0
          %634 = vmatprep.subr.bf16.mxu0 0
          %635 = vmatpush1.bf16.msra.mxu0 0
          %636 = vmatprep.subr.bf16.mxu0 0
          %637 = vmatpush1.bf16.msra.mxu0 0
          %638 = vmatprep.subr.bf16.mxu0 0
          %639 = vmatpush1.bf16.msra.mxu0 0
          %640 = vmatprep.subr.bf16.mxu0 0
          %641 = vmatpush1.bf16.msra.mxu0 0
          %642 = vmatprep.subr.bf16.mxu0 0
          %643 = vmatpush1.bf16.msra.mxu0 0
          %644 = vmatprep.subr.bf16.mxu0 0
          %645 = vmatpush1.bf16.msra.mxu0 0
          %646 = vmatprep.subr.bf16.mxu0 0
          %647 = vmatpush1.bf16.msra.mxu0 0
          %648 = vmatprep.subr.bf16.mxu0 0
          %649 = vmatpush1.bf16.msra.mxu0 0
          %650 = vmatprep.mubr.bf16.mxu0 0
          %651 = vmatmul.mubr.bf16.gmra.mrb[0].mxu0 %v523
          %v652 = vpop.f32.mrb[0].mxu0
          %v653 = vadd.f32 %v347, %v652
          %v654 = vpop.f32.mrb[0].mxu0
          %v655 = vpop.f32.mrb[0].mxu0
          %v656 = vadd.f32 %v347, %v655
          %v657 = vpop.f32.mrb[0].mxu0
          %658 = vmatprep.mubr.bf16.mxu0 0
          %659 = vmatmul.mubr.bf16.gmra.mrb[0].mxu0 %v526
          %v660 = vpop.f32.mrb[0].mxu0
          %v661 = vadd.f32 %v347, %v660
          %v662 = vpop.f32.mrb[0].mxu0
          %v663 = vpop.f32.mrb[0].mxu0
          %v664 = vadd.f32 %v347, %v663
          %v665 = vpop.f32.mrb[0].mxu0
          %666 = vmatprep.mubr.bf16.mxu0 0
          %667 = vmatmul.mubr.bf16.gmra.mrb[0].mxu0 %v529
          %v668 = vpop.f32.mrb[0].mxu0
          %v669 = vadd.f32 %v347, %v668
          %v670 = vpop.f32.mrb[0].mxu0
          %v671 = vpop.f32.mrb[0].mxu0
          %v672 = vadd.f32 %v347, %v671
          %v673 = vpop.f32.mrb[0].mxu0
          %674 = vmatprep.mubr.bf16.mxu0 0
          %675 = vmatmul.mubr.bf16.gmra.mrb[0].mxu0 %v532
          %v676 = vpop.f32.mrb[0].mxu0
          %v677 = vadd.f32 %v347, %v676
          %v678 = vpop.f32.mrb[0].mxu0
          %v679 = vpop.f32.mrb[0].mxu0
          %v680 = vadd.f32 %v347, %v679
          %v681 = vpop.f32.mrb[0].mxu0
          %682 = vmatprep.mubr.bf16.mxu0 0
          %683 = vmatmul.mubr.bf16.gmra.mrb[0].mxu0 %v535
          %v684 = vpop.f32.mrb[0].mxu0
          %v685 = vadd.f32 %v347, %v684
          %v686 = vpop.f32.mrb[0].mxu0
          %v687 = vpop.f32.mrb[0].mxu0
          %v688 = vadd.f32 %v347, %v687
          %v689 = vpop.f32.mrb[0].mxu0
          %690 = vmatprep.mubr.bf16.mxu0 0
          %691 = vmatmul.mubr.bf16.gmra.mrb[0].mxu0 %v538
          %v692 = vpop.f32.mrb[0].mxu0
          %v693 = vadd.f32 %v347, %v692
          %v694 = vpop.f32.mrb[0].mxu0
          %v695 = vpop.f32.mrb[0].mxu0
          %v696 = vadd.f32 %v347, %v695
          %v697 = vpop.f32.mrb[0].mxu0
          %698 = vmatprep.mubr.bf16.mxu0 0
          %699 = vmatmul.mubr.bf16.gmra.mrb[0].mxu0 %v541
          %v700 = vpop.f32.mrb[0].mxu0
          %v701 = vadd.f32 %v347, %v700
          %v702 = vpop.f32.mrb[0].mxu0
          %v703 = vpop.f32.mrb[0].mxu0
          %v704 = vadd.f32 %v347, %v703
          %v705 = vpop.f32.mrb[0].mxu0
          %706 = vmatprep.mubr.bf16.mxu0 0
          %707 = vmatmul.mubr.bf16.gmra.mrb[0].mxu0 %v544
          %v708 = vpop.f32.mrb[0].mxu0
          %v709 = vadd.f32 %v347, %v708
          %v710 = vpop.f32.mrb[0].mxu0
          %v711 = vpop.f32.mrb[0].mxu0
          %v712 = vadd.f32 %v347, %v711
          %v713 = vpop.f32.mrb[0].mxu0
          %714 = vmatprep.mubr.bf16.mxu0 0
          %715 = vmatmul.mubr.bf16.gmra.mrb[0].mxu0 %v547
          %v716 = vpop.f32.mrb[0].mxu0
          %v717 = vadd.f32 %v347, %v716
          %v718 = vpop.f32.mrb[0].mxu0
          %v719 = vpop.f32.mrb[0].mxu0
          %v720 = vadd.f32 %v347, %v719
          %v721 = vpop.f32.mrb[0].mxu0
          %722 = vmatprep.mubr.bf16.mxu0 0
          %723 = vmatmul.mubr.bf16.gmra.mrb[0].mxu0 %v550
          %v724 = vpop.f32.mrb[0].mxu0
          %v725 = vadd.f32 %v347, %v724
          %v726 = vpop.f32.mrb[0].mxu0
          %v727 = vpop.f32.mrb[0].mxu0
          %v728 = vadd.f32 %v347, %v727
          %v729 = vpop.f32.mrb[0].mxu0
          %730 = vmatprep.mubr.bf16.mxu0 0
          %731 = vmatmul.mubr.bf16.gmra.mrb[0].mxu0 %v553
          %v732 = vpop.f32.mrb[0].mxu0
          %v733 = vadd.f32 %v347, %v732
          %v734 = vpop.f32.mrb[0].mxu0
          %v735 = vpop.f32.mrb[0].mxu0
          %v736 = vadd.f32 %v347, %v735
          %v737 = vpop.f32.mrb[0].mxu0
          %738 = vmatprep.mubr.bf16.mxu0 0
          %739 = vmatmul.mubr.bf16.gmra.mrb[0].mxu0 %v556
          %v740 = vpop.f32.mrb[0].mxu0
          %v741 = vadd.f32 %v347, %v740
          %v742 = vpop.f32.mrb[0].mxu0
          %v743 = vpop.f32.mrb[0].mxu0
          %v744 = vadd.f32 %v347, %v743
          %v745 = vpop.f32.mrb[0].mxu0
          %746 = vmatprep.mubr.bf16.mxu0 0
          %747 = vmatmul.mubr.bf16.gmra.mrb[0].mxu0 %v559
          %v748 = vpop.f32.mrb[0].mxu0
          %v749 = vadd.f32 %v347, %v748
          %v750 = vpop.f32.mrb[0].mxu0
          %v751 = vpop.f32.mrb[0].mxu0
          %v752 = vadd.f32 %v347, %v751
          %v753 = vpop.f32.mrb[0].mxu0
          %754 = vmatprep.mubr.bf16.mxu0 0
          %755 = vmatmul.mubr.bf16.gmra.mrb[0].mxu0 %v562
          %v756 = vpop.f32.mrb[0].mxu0
          %v757 = vadd.f32 %v347, %v756
          %v758 = vpop.f32.mrb[0].mxu0
          %v759 = vpop.f32.mrb[0].mxu0
          %v760 = vadd.f32 %v347, %v759
          %v761 = vpop.f32.mrb[0].mxu0
          %762 = vmatprep.mubr.bf16.mxu0 0
          %763 = vmatmul.mubr.bf16.gmra.mrb[0].mxu0 %v565
          %v764 = vpop.f32.mrb[0].mxu0
          %v765 = vadd.f32 %v347, %v764
          %v766 = vpop.f32.mrb[0].mxu0
          %v767 = vpop.f32.mrb[0].mxu0
          %v768 = vadd.f32 %v347, %v767
          %v769 = vpop.f32.mrb[0].mxu0
          %770 = vmatprep.mubr.bf16.mxu0 0
          %771 = vmatmul.mubr.bf16.gmra.mrb[0].mxu0 %v568
          %v772 = vpop.f32.mrb[0].mxu0
          %v773 = vadd.f32 %v347, %v772
          %v774 = vpop.f32.mrb[0].mxu0
          %v775 = vpop.f32.mrb[0].mxu0
          %v776 = vadd.f32 %v347, %v775
          %v777 = vpop.f32.mrb[0].mxu0
          %778 = vmatprep.mubr.bf16.mxu0 0
          %779 = vmatmul.mubr.bf16.gmra.mrb[0].mxu0 %v571
          %v780 = vpop.f32.mrb[0].mxu0
          %v781 = vadd.f32 %v347, %v780
          %v782 = vpop.f32.mrb[0].mxu0
          %v783 = vpop.f32.mrb[0].mxu0
          %v784 = vadd.f32 %v347, %v783
          %v785 = vpop.f32.mrb[0].mxu0
          %786 = vmatprep.mubr.bf16.mxu0 0
          %787 = vmatmul.mubr.bf16.gmra.mrb[0].mxu0 %v574
          %v788 = vpop.f32.mrb[0].mxu0
          %v789 = vadd.f32 %v347, %v788
          %v790 = vpop.f32.mrb[0].mxu0
          %v791 = vpop.f32.mrb[0].mxu0
          %v792 = vadd.f32 %v347, %v791
          %v793 = vpop.f32.mrb[0].mxu0
          %794 = vmatprep.mubr.bf16.mxu0 0
          %795 = vmatmul.mubr.bf16.gmra.mrb[0].mxu0 %v577
          %v796 = vpop.f32.mrb[0].mxu0
          %v797 = vadd.f32 %v347, %v796
          %v798 = vpop.f32.mrb[0].mxu0
          %v799 = vpop.f32.mrb[0].mxu0
          %v800 = vadd.f32 %v347, %v799
          %v801 = vpop.f32.mrb[0].mxu0
          %802 = vmatprep.mubr.bf16.mxu0 0
          %803 = vmatmul.mubr.bf16.gmra.mrb[0].mxu0 %v580
          %v804 = vpop.f32.mrb[0].mxu0
          %v805 = vadd.f32 %v347, %v804
          %v806 = vpop.f32.mrb[0].mxu0
          %v807 = vpop.f32.mrb[0].mxu0
          %v808 = vadd.f32 %v347, %v807
          %v809 = vpop.f32.mrb[0].mxu0
          %810 = vmatprep.mubr.bf16.mxu0 0
          %811 = vmatmul.mubr.bf16.gmra.mrb[0].mxu0 %v583
          %v812 = vpop.f32.mrb[0].mxu0
          %v813 = vadd.f32 %v347, %v812
          %v814 = vpop.f32.mrb[0].mxu0
          %v815 = vpop.f32.mrb[0].mxu0
          %v816 = vadd.f32 %v347, %v815
          %v817 = vpop.f32.mrb[0].mxu0
          %818 = vmatprep.mubr.bf16.mxu0 0
          %819 = vmatmul.mubr.bf16.gmra.mrb[0].mxu0 %v586
          %v820 = vpop.f32.mrb[0].mxu0
          %v821 = vadd.f32 %v347, %v820
          %v822 = vpop.f32.mrb[0].mxu0
          %v823 = vpop.f32.mrb[0].mxu0
          %v824 = vadd.f32 %v347, %v823
          %v825 = vpop.f32.mrb[0].mxu0
          %826 = vmatprep.mubr.bf16.mxu0 0
          %827 = vmatmul.mubr.bf16.gmra.mrb[0].mxu0 %v589
          %v828 = vpop.f32.mrb[0].mxu0
          %v829 = vadd.f32 %v347, %v828
          %v830 = vpop.f32.mrb[0].mxu0
          %v831 = vpop.f32.mrb[0].mxu0
          %v832 = vadd.f32 %v347, %v831
          %v833 = vpop.f32.mrb[0].mxu0
          %834 = vmatprep.mubr.bf16.mxu0 0
          %835 = vmatmul.mubr.bf16.gmra.mrb[0].mxu0 %v592
          %v836 = vpop.f32.mrb[0].mxu0
          %v837 = vadd.f32 %v347, %v836
          %v838 = vpop.f32.mrb[0].mxu0
          %v839 = vpop.f32.mrb[0].mxu0
          %v840 = vadd.f32 %v347, %v839
          %v841 = vpop.f32.mrb[0].mxu0
          %842 = vmatprep.mubr.bf16.mxu0 0
          %843 = vmatmul.mubr.bf16.gmra.mrb[0].mxu0 %v595
          %v844 = vpop.f32.mrb[0].mxu0
          %v845 = vadd.f32 %v347, %v844
          %v846 = vpop.f32.mrb[0].mxu0
          %v847 = vpop.f32.mrb[0].mxu0
          %v848 = vadd.f32 %v347, %v847
          %v849 = vpop.f32.mrb[0].mxu0
          %850 = vmatprep.mubr.bf16.mxu0 0
          %851 = vmatmul.mubr.bf16.gmra.mrb[0].mxu0 %v598
          %v852 = vpop.f32.mrb[0].mxu0
          %v853 = vadd.f32 %v347, %v852
          %v854 = vpop.f32.mrb[0].mxu0
          %v855 = vpop.f32.mrb[0].mxu0
          %v856 = vadd.f32 %v347, %v855
          %v857 = vpop.f32.mrb[0].mxu0
          %858 = vmatprep.mubr.bf16.mxu0 0
          %859 = vmatmul.mubr.bf16.gmra.mrb[0].mxu0 %v601
          %v860 = vpop.f32.mrb[0].mxu0
          %v861 = vadd.f32 %v347, %v860
          %v862 = vpop.f32.mrb[0].mxu0
          %v863 = vpop.f32.mrb[0].mxu0
          %v864 = vadd.f32 %v347, %v863
          %v865 = vpop.f32.mrb[0].mxu0
          %866 = vmatprep.mubr.bf16.mxu0 0
          %867 = vmatmul.mubr.bf16.gmra.mrb[0].mxu0 %v604
          %v868 = vpop.f32.mrb[0].mxu0
          %v869 = vadd.f32 %v347, %v868
          %v870 = vpop.f32.mrb[0].mxu0
          %v871 = vpop.f32.mrb[0].mxu0
          %v872 = vadd.f32 %v347, %v871
          %v873 = vpop.f32.mrb[0].mxu0
          %874 = vmatprep.mubr.bf16.mxu0 0
          %875 = vmatmul.mubr.bf16.gmra.mrb[0].mxu0 %v607
          %v876 = vpop.f32.mrb[0].mxu0
          %v877 = vadd.f32 %v347, %v876
          %v878 = vpop.f32.mrb[0].mxu0
          %v879 = vpop.f32.mrb[0].mxu0
          %v880 = vadd.f32 %v347, %v879
          %v881 = vpop.f32.mrb[0].mxu0
          %882 = vmatprep.mubr.bf16.mxu0 0
          %883 = vmatmul.mubr.bf16.gmra.mrb[0].mxu0 %v610
          %v884 = vpop.f32.mrb[0].mxu0
          %v885 = vadd.f32 %v347, %v884
          %v886 = vpop.f32.mrb[0].mxu0
          %v887 = vpop.f32.mrb[0].mxu0
          %v888 = vadd.f32 %v347, %v887
          %v889 = vpop.f32.mrb[0].mxu0
          %890 = vmatprep.mubr.bf16.mxu0 0
          %891 = vmatmul.mubr.bf16.gmra.mrb[0].mxu0 %v613
          %v892 = vpop.f32.mrb[0].mxu0
          %v893 = vadd.f32 %v347, %v892
          %v894 = vpop.f32.mrb[0].mxu0
          %v895 = vpop.f32.mrb[0].mxu0
          %v896 = vadd.f32 %v347, %v895
          %v897 = vpop.f32.mrb[0].mxu0
          %898 = vmatprep.mubr.bf16.mxu0 0
          %899 = vmatmul.mubr.bf16.gmra.mrb[0].mxu0 %v616
          %v900 = vpop.f32.mrb[0].mxu0
          %v901 = vadd.f32 %v347, %v900
          %v902 = vpop.f32.mrb[0].mxu0
          %v903 = vpop.f32.mrb[0].mxu0
          %v904 = vadd.f32 %v347, %v903
          %v905 = vpop.f32.mrb[0].mxu0
          %906 = vdwg.mxu0
          %v907 = vtanh.pop %v653
          %v908 = vtanh.pop %v656
          %v909 = vtanh.pop %v661
          %v910 = vtanh.pop %v664
          %v911 = vtanh.pop %v669
          %v912 = vtanh.pop %v672
          %v913 = vtanh.pop %v677
          %v914 = vtanh.pop %v680
          %v915 = vtanh.pop %v685
          %v916 = vtanh.pop %v688
          %v917 = vtanh.pop %v693
          %v918 = vtanh.pop %v696
          %v919 = vtanh.pop %v701
          %v920 = vtanh.pop %v704
          %v921 = vtanh.pop %v709
          %v922 = vtanh.pop %v712
          %v923 = vtanh.pop %v717
          %v924 = vtanh.pop %v720
          %v925 = vtanh.pop %v725
          %v926 = vtanh.pop %v728
          %v927 = vtanh.pop %v733
          %v928 = vtanh.pop %v736
          %v929 = vtanh.pop %v741
          %v930 = vtanh.pop %v744
          %v931 = vtanh.pop %v749
          %v932 = vtanh.pop %v752
          %v933 = vtanh.pop %v757
          %v934 = vtanh.pop %v760
          %v935 = vtanh.pop %v765
          %v936 = vtanh.pop %v768
          %v937 = vtanh.pop %v773
          %v938 = vtanh.pop %v776
          %v939 = vtanh.pop %v781
          %v940 = vtanh.pop %v784
          %v941 = vtanh.pop %v789
          %v942 = vtanh.pop %v792
          %v943 = vtanh.pop %v797
          %v944 = vtanh.pop %v800
          %v945 = vtanh.pop %v805
          %v946 = vtanh.pop %v808
          %v947 = vtanh.pop %v813
          %v948 = vtanh.pop %v816
          %v949 = vtanh.pop %v821
          %v950 = vtanh.pop %v824
          %v951 = vtanh.pop %v829
          %v952 = vtanh.pop %v832
          %v953 = vtanh.pop %v837
          %v954 = vtanh.pop %v840
          %v955 = vtanh.pop %v845
          %v956 = vtanh.pop %v848
          %v957 = vtanh.pop %v853
          %v958 = vtanh.pop %v856
          %v959 = vtanh.pop %v861
          %v960 = vtanh.pop %v864
          %v961 = vtanh.pop %v869
          %v962 = vtanh.pop %v872
          %v963 = vtanh.pop %v877
          %v964 = vtanh.pop %v880
          %v965 = vtanh.pop %v885
          %v966 = vtanh.pop %v888
          %v967 = vtanh.pop %v893
          %v968 = vtanh.pop %v896
          %v969 = vtanh.pop %v901
          %v970 = vtanh.pop %v904
          %v971 = vld [vmem:[%s4] sm:$0x1]
          %s972 = sld [smem:[#allocation7]]
          %v973 = vstv %s972
          %v975 = vsel %vm521, %v971, 0
          %v978 = vsel %vm521, %v907, 0
          %v981 = vsel %vm521, %v908, 0
          %v984 = vsel %vm521, %v909, 0
          %v987 = vsel %vm521, %v910, 0
          %v990 = vsel %vm521, %v911, 0
          %v993 = vsel %vm521, %v912, 0
          %v996 = vsel %vm521, %v913, 0
          %v999 = vsel %vm521, %v914, 0
          %v1002 = vsel %vm521, %v915, 0
          %v1005 = vsel %vm521, %v916, 0
          %v1008 = vsel %vm521, %v917, 0
          %v1011 = vsel %vm521, %v918, 0
          %v1014 = vsel %vm521, %v919, 0
          %v1017 = vsel %vm521, %v920, 0
          %v1020 = vsel %vm521, %v921, 0
          %v1023 = vsel %vm521, %v922, 0
          %v1026 = vsel %vm521, %v923, 0
          %v1029 = vsel %vm521, %v924, 0
          %v1032 = vsel %vm521, %v925, 0
          %v1035 = vsel %vm521, %v926, 0
          %v1038 = vsel %vm521, %v927, 0
          %v1041 = vsel %vm521, %v928, 0
          %v1044 = vsel %vm521, %v929, 0
          %v1047 = vsel %vm521, %v930, 0
          %v1050 = vsel %vm521, %v931, 0
          %v1053 = vsel %vm521, %v932, 0
          %v1056 = vsel %vm521, %v933, 0
          %v1059 = vsel %vm521, %v934, 0
          %v1062 = vsel %vm521, %v935, 0
          %v1065 = vsel %vm521, %v936, 0
          %v1068 = vsel %vm521, %v937, 0
          %v1071 = vsel %vm521, %v938, 0
          %v1074 = vsel %vm521, %v939, 0
          %v1077 = vsel %vm521, %v940, 0
          %v1080 = vsel %vm521, %v941, 0
          %v1083 = vsel %vm521, %v942, 0
          %v1086 = vsel %vm521, %v943, 0
          %v1089 = vsel %vm521, %v944, 0
          %v1092 = vsel %vm521, %v945, 0
          %v1095 = vsel %vm521, %v946, 0
          %v1098 = vsel %vm521, %v947, 0
          %v1101 = vsel %vm521, %v948, 0
          %v1104 = vsel %vm521, %v949, 0
          %v1107 = vsel %vm521, %v950, 0
          %v1110 = vsel %vm521, %v951, 0
          %v1113 = vsel %vm521, %v952, 0
          %v1116 = vsel %vm521, %v953, 0
          %v1119 = vsel %vm521, %v954, 0
          %v1122 = vsel %vm521, %v955, 0
          %v1125 = vsel %vm521, %v956, 0
          %v1128 = vsel %vm521, %v957, 0
          %v1131 = vsel %vm521, %v958, 0
          %v1134 = vsel %vm521, %v959, 0
          %v1137 = vsel %vm521, %v960, 0
          %v1140 = vsel %vm521, %v961, 0
          %v1143 = vsel %vm521, %v962, 0
          %v1146 = vsel %vm521, %v963, 0
          %v1149 = vsel %vm521, %v964, 0
          %v1152 = vsel %vm521, %v965, 0
          %v1155 = vsel %vm521, %v966, 0
          %v1158 = vsel %vm521, %v967, 0
          %v1161 = vsel %vm521, %v968, 0
          %v1164 = vsel %vm521, %v969, 0
          %v1167 = vsel %vm521, %v970, 0
          %1169 = vmatprep.subr.mxu0 0.0
          %1170 = vmatpush1.xpose.msra.mxu0 %v978
          %1171 = vmatprep.subr.mxu0 0.0
          %1172 = vmatpush1.xpose.msra.mxu0 %v981
          %1173 = vmatprep.subr.mxu0 0.0
          %1174 = vmatpush1.xpose.msra.mxu0 %v984
          %1175 = vmatprep.subr.mxu0 0.0
          %1176 = vmatpush1.xpose.msra.mxu0 %v987
          %1177 = vmatprep.subr.mxu0 0.0
          %1178 = vmatpush1.xpose.msra.mxu0 %v990
          %1179 = vmatprep.subr.mxu0 0.0
          %1180 = vmatpush1.xpose.msra.mxu0 %v993
          %1181 = vmatprep.subr.mxu0 0.0
          %1182 = vmatpush1.xpose.msra.mxu0 %v996
          %1183 = vmatprep.subr.mxu0 0.0
          %1184 = vmatpush1.xpose.msra.mxu0 %v999
          %1185 = vmatprep.subr.mxu0 0.0
          %1186 = vmatpush1.xpose.msra.mxu0 %v1002
          %1187 = vmatprep.subr.mxu0 0.0
          %1188 = vmatpush1.xpose.msra.mxu0 %v1005
          %1189 = vmatprep.subr.mxu0 0.0
          %1190 = vmatpush1.xpose.msra.mxu0 %v1008
          %1191 = vmatprep.subr.mxu0 0.0
          %1192 = vmatpush1.xpose.msra.mxu0 %v1011
          %1193 = vmatprep.subr.mxu0 0.0
          %1194 = vmatpush1.xpose.msra.mxu0 %v1014
          %1195 = vmatprep.subr.mxu0 0.0
          %1196 = vmatpush1.xpose.msra.mxu0 %v1017
          %1197 = vmatprep.subr.mxu0 0.0
          %1198 = vmatpush1.xpose.msra.mxu0 %v1020
          %1199 = vmatprep.subr.mxu0 0.0
          %1200 = vmatpush1.xpose.msra.mxu0 %v1023
          %1201 = vmatprep.subr.mxu0 0.0
          %1202 = vmatpush1.xpose.msra.mxu0 %v1026
          %1203 = vmatprep.subr.mxu0 0.0
          %1204 = vmatpush1.xpose.msra.mxu0 %v1029
          %1205 = vmatprep.subr.mxu0 0.0
          %1206 = vmatpush1.xpose.msra.mxu0 %v1032
          %1207 = vmatprep.subr.mxu0 0.0
          %1208 = vmatpush1.xpose.msra.mxu0 %v1035
          %1209 = vmatprep.subr.mxu0 0.0
          %1210 = vmatpush1.xpose.msra.mxu0 %v1038
          %1211 = vmatprep.subr.mxu0 0.0
          %1212 = vmatpush1.xpose.msra.mxu0 %v1041
          %1213 = vmatprep.subr.mxu0 0.0
          %1214 = vmatpush1.xpose.msra.mxu0 %v1044
          %1215 = vmatprep.subr.mxu0 0.0
          %1216 = vmatpush1.xpose.msra.mxu0 %v1047
          %1217 = vmatprep.subr.mxu0 0.0
          %1218 = vmatpush1.xpose.msra.mxu0 %v1050
          %1219 = vmatprep.subr.mxu0 0.0
          %1220 = vmatpush1.xpose.msra.mxu0 %v1053
          %1221 = vmatprep.subr.mxu0 0.0
          %1222 = vmatpush1.xpose.msra.mxu0 %v1056
          %1223 = vmatprep.subr.mxu0 0.0
          %1224 = vmatpush1.xpose.msra.mxu0 %v1059
          %1225 = vmatprep.subr.mxu0 0.0
          %1226 = vmatpush1.xpose.msra.mxu0 %v1062
          %1227 = vmatprep.subr.mxu0 0.0
          %1228 = vmatpush1.xpose.msra.mxu0 %v1065
          %1229 = vmatprep.subr.mxu0 0.0
          %1230 = vmatpush1.xpose.msra.mxu0 %v1068
          %1231 = vmatprep.subr.mxu0 0.0
          %1232 = vmatpush1.xpose.msra.mxu0 %v1071
          %1233 = vmatprep.mubr.f32.mxu0 0.0
          %1234 = vmatmul.mubr.f32.gmra.mrb[0].mxu0 %v975
          %v1235 = vpop.f32.mrb[0].mxu0
          %v1236 = vadd.f32 %v973, %v1235
          %v1237 = vpop.f32.mrb[0].mxu0
          %v1238 = vadd.f32 %v973, %v1237
          %1239 = vdwg.mxu0
          %1240 = vmatprep.subr.mxu0 0.0
          %1241 = vmatpush1.xpose.msra.mxu0 %v1074
          %1242 = vmatprep.subr.mxu0 0.0
          %1243 = vmatpush1.xpose.msra.mxu0 %v1077
          %1244 = vmatprep.subr.mxu0 0.0
          %1245 = vmatpush1.xpose.msra.mxu0 %v1080
          %1246 = vmatprep.subr.mxu0 0.0
          %1247 = vmatpush1.xpose.msra.mxu0 %v1083
          %1248 = vmatprep.subr.mxu0 0.0
          %1249 = vmatpush1.xpose.msra.mxu0 %v1086
          %1250 = vmatprep.subr.mxu0 0.0
          %1251 = vmatpush1.xpose.msra.mxu0 %v1089
          %1252 = vmatprep.subr.mxu0 0.0
          %1253 = vmatpush1.xpose.msra.mxu0 %v1092
          %1254 = vmatprep.subr.mxu0 0.0
          %1255 = vmatpush1.xpose.msra.mxu0 %v1095
          %1256 = vmatprep.subr.mxu0 0.0
          %1257 = vmatpush1.xpose.msra.mxu0 %v1098
          %1258 = vmatprep.subr.mxu0 0.0
          %1259 = vmatpush1.xpose.msra.mxu0 %v1101
          %1260 = vmatprep.subr.mxu0 0.0
          %1261 = vmatpush1.xpose.msra.mxu0 %v1104
          %1262 = vmatprep.subr.mxu0 0.0
          %1263 = vmatpush1.xpose.msra.mxu0 %v1107
          %1264 = vmatprep.subr.mxu0 0.0
          %1265 = vmatpush1.xpose.msra.mxu0 %v1110
          %1266 = vmatprep.subr.mxu0 0.0
          %1267 = vmatpush1.xpose.msra.mxu0 %v1113
          %1268 = vmatprep.subr.mxu0 0.0
          %1269 = vmatpush1.xpose.msra.mxu0 %v1116
          %1270 = vmatprep.subr.mxu0 0.0
          %1271 = vmatpush1.xpose.msra.mxu0 %v1119
          %1272 = vmatprep.subr.mxu0 0.0
          %1273 = vmatpush1.xpose.msra.mxu0 %v1122
          %1274 = vmatprep.subr.mxu0 0.0
          %1275 = vmatpush1.xpose.msra.mxu0 %v1125
          %1276 = vmatprep.subr.mxu0 0.0
          %1277 = vmatpush1.xpose.msra.mxu0 %v1128
          %1278 = vmatprep.subr.mxu0 0.0
          %1279 = vmatpush1.xpose.msra.mxu0 %v1131
          %1280 = vmatprep.subr.mxu0 0.0
          %1281 = vmatpush1.xpose.msra.mxu0 %v1134
          %1282 = vmatprep.subr.mxu0 0.0
          %1283 = vmatpush1.xpose.msra.mxu0 %v1137
          %1284 = vmatprep.subr.mxu0 0.0
          %1285 = vmatpush1.xpose.msra.mxu0 %v1140
          %1286 = vmatprep.subr.mxu0 0.0
          %1287 = vmatpush1.xpose.msra.mxu0 %v1143
          %1288 = vmatprep.subr.mxu0 0.0
          %1289 = vmatpush1.xpose.msra.mxu0 %v1146
          %1290 = vmatprep.subr.mxu0 0.0
          %1291 = vmatpush1.xpose.msra.mxu0 %v1149
          %1292 = vmatprep.subr.mxu0 0.0
          %1293 = vmatpush1.xpose.msra.mxu0 %v1152
          %1294 = vmatprep.subr.mxu0 0.0
          %1295 = vmatpush1.xpose.msra.mxu0 %v1155
          %1296 = vmatprep.subr.mxu0 0.0
          %1297 = vmatpush1.xpose.msra.mxu0 %v1158
          %1298 = vmatprep.subr.mxu0 0.0
          %1299 = vmatpush1.xpose.msra.mxu0 %v1161
          %1300 = vmatprep.subr.mxu0 0.0
          %1301 = vmatpush1.xpose.msra.mxu0 %v1164
          %1302 = vmatprep.subr.mxu0 0.0
          %1303 = vmatpush1.xpose.msra.mxu0 %v1167
          %1304 = vmatprep.mubr.f32.mxu0 0.0
          %1305 = vmatmul.mubr.f32.gmra.mrb[0].mxu0 %v975
          %v1306 = vpop.f32.mrb[0].mxu0
          %v1307 = vadd.f32 %v973, %v1306
          %v1308 = vpop.f32.mrb[0].mxu0
          %v1309 = vadd.f32 %v973, %v1308
          %1310 = vdwg.mxu0
          %v1311 = vlaneseq
          %v1312 = vand.u32 %v1311, 127
          %v1313 = vadd.s32 %v1312, 128
          %v1314 = vadd.s32 %v1312, 256
          %v1315 = vadd.s32 %v1312, 384
          %v1316 = vstv %s269
          %v1317 = vadd.s32 %v1312, %v1316
          %v1318 = vadd.s32 %v1313, %v1316
          %v1319 = vadd.s32 %v1314, %v1316
          %v1320 = vadd.s32 %v1315, %v1316
          %v1321 = vstv %s259
          %vm1322 = vcmp.lt.s32.totalorder %v1317, %v1321
          %vm1323 = vcmp.lt.s32.totalorder %v1318, %v1321
          %vm1324 = vcmp.lt.s32.totalorder %v1319, %v1321
          %vm1325 = vcmp.lt.s32.totalorder %v1320, %v1321
          %v1326 = vsel %vm1322, 0.0, -100000.0
          %v1327 = vsel %vm1323, 0.0, -100000.0
          %v1328 = vsel %vm1324, 0.0, -100000.0
          %v1329 = vsel %vm1325, 0.0, -100000.0
          %v1330 = vadd.f32 %v1236, %v1326
          %v1331 = vadd.f32 %v1238, %v1327
          %v1332 = vadd.f32 %v1307, %v1328
          %v1333 = vadd.f32 %v1309, %v1329
          %v1334 = vld [vmem:[#allocation2] sm:$0x1]
          %vm1335 = vcmask 1040384
          %v1336 = vsel %vm1335, %v1330, -inf
          %v1337 = vsel %vm1335, %v1331, -inf
          %v1338 = vsel %vm1335, %v1332, -inf
          %v1339 = vsel %vm1335, %v1333, -inf
          %v1340 = vmax.f32 %v1336, %v1337
          %v1341 = vmax.f32 %v1338, %v1339
          %v1342 = vmax.f32 %v1340, %v1341
          %1343 = vmax.xlane.f32.xlu0 %v1342
          %v1344 = vpop.xlane.xlu0 %1343
          %v1345 = vmax.f32 %v1334, %v1344
          %v1346 = vsub.f32 %v1334, %v1345
          %v1347 = vmul.f32 %v1346, 1.442695
          %v1348 = vpow.pop %v1347
          %1350 = vset.pattern.permute.xlu0 0
          %1351 = vperm.xlu0 %1350, %v1345
          %v1352 = vpop.permute.xlu0 %1351
          %v1354 = vlaneseq
          %v1355 = vshrl.u32 %v1354, 7
          %v1356 = vsub.s32 0, %v1355
          %v1357 = vrot.slane %v1352, %v1356
          %v1358 = vsub.f32 %v1330, %v1357
          %v1359 = vsub.f32 %v1331, %v1357
          %v1360 = vsub.f32 %v1332, %v1357
          %v1361 = vsub.f32 %v1333, %v1357
          %v1362 = vmul.f32 %v1358, 1.442695
          %v1363 = vpow.pop %v1362
          %v1364 = vmul.f32 %v1359, 1.442695
          %v1365 = vpow.pop %v1364
          %v1366 = vmul.f32 %v1360, 1.442695
          %v1367 = vpow.pop %v1366
          %v1368 = vmul.f32 %v1361, 1.442695
          %v1369 = vpow.pop %v1368
          %v1370 = vld [vmem:[#allocation3] sm:$0x1]
          %v1371 = vmul.f32 %v1348, %v1370
          %v1372 = vsel %vm1335, %v1363, 0.0
          %v1373 = vsel %vm1335, %v1365, 0.0
          %v1374 = vadd.f32 %v1372, %v1373
          %v1375 = vsel %vm1335, %v1367, 0.0
          %v1376 = vadd.f32 %v1374, %v1375
          %v1377 = vsel %vm1335, %v1369, 0.0
          %v1378 = vadd.f32 %v1376, %v1377
          %1379 = vadd.xlane.f32.xlu0 %v1378
          %v1380 = vpop.xlane.xlu0 %1379
          %v1381 = vadd.f32 %v1371, %v1380
          %vm1382 = vcmask 0
          %1383 = vst.msk [vmem:[#allocation3] sm:$0x1] %vm1382, %v1381
          %v1384 = vld [vmem:[#allocation4] sm:$0x1]
          %1386 = vset.pattern.permute.xlu0 0
          %1387 = vperm.xlu0 %1386, %v1348
          %v1388 = vpop.permute.xlu0 %1387
          %v1390 = vlaneseq
          %v1391 = vshrl.u32 %v1390, 7
          %v1392 = vsub.s32 0, %v1391
          %v1393 = vrot.slane %v1388, %v1392
          %v1394 = vmul.f32 %v1393, %v1384
          %1395 = vmatprep.subr.mxu0 0.0
          %1396 = vmatpush1.msra.mxu0 %v907
          %1397 = vmatprep.subr.mxu0 0.0
          %1398 = vmatpush1.msra.mxu0 %v908
          %1399 = vmatprep.subr.mxu0 0.0
          %1400 = vmatpush1.msra.mxu0 %v909
          %1401 = vmatprep.subr.mxu0 0.0
          %1402 = vmatpush1.msra.mxu0 %v910
          %1403 = vmatprep.subr.mxu0 0.0
          %1404 = vmatpush1.msra.mxu0 %v911
          %1405 = vmatprep.subr.mxu0 0.0
          %1406 = vmatpush1.msra.mxu0 %v912
          %1407 = vmatprep.subr.mxu0 0.0
          %1408 = vmatpush1.msra.mxu0 %v913
          %1409 = vmatprep.subr.mxu0 0.0
          %1410 = vmatpush1.msra.mxu0 %v914
          %1411 = vmatprep.subr.mxu0 0.0
          %1412 = vmatpush1.msra.mxu0 %v915
          %1413 = vmatprep.subr.mxu0 0.0
          %1414 = vmatpush1.msra.mxu0 %v916
          %1415 = vmatprep.subr.mxu0 0.0
          %1416 = vmatpush1.msra.mxu0 %v917
          %1417 = vmatprep.subr.mxu0 0.0
          %1418 = vmatpush1.msra.mxu0 %v918
          %1419 = vmatprep.subr.mxu0 0.0
          %1420 = vmatpush1.msra.mxu0 %v919
          %1421 = vmatprep.subr.mxu0 0.0
          %1422 = vmatpush1.msra.mxu0 %v920
          %1423 = vmatprep.subr.mxu0 0.0
          %1424 = vmatpush1.msra.mxu0 %v921
          %1425 = vmatprep.subr.mxu0 0.0
          %1426 = vmatpush1.msra.mxu0 %v922
          %1427 = vmatprep.subr.mxu0 0.0
          %1428 = vmatpush1.msra.mxu0 %v923
          %1429 = vmatprep.subr.mxu0 0.0
          %1430 = vmatpush1.msra.mxu0 %v924
          %1431 = vmatprep.subr.mxu0 0.0
          %1432 = vmatpush1.msra.mxu0 %v925
          %1433 = vmatprep.subr.mxu0 0.0
          %1434 = vmatpush1.msra.mxu0 %v926
          %1435 = vmatprep.subr.mxu0 0.0
          %1436 = vmatpush1.msra.mxu0 %v927
          %1437 = vmatprep.subr.mxu0 0.0
          %1438 = vmatpush1.msra.mxu0 %v928
          %1439 = vmatprep.subr.mxu0 0.0
          %1440 = vmatpush1.msra.mxu0 %v929
          %1441 = vmatprep.subr.mxu0 0.0
          %1442 = vmatpush1.msra.mxu0 %v930
          %1443 = vmatprep.subr.mxu0 0.0
          %1444 = vmatpush1.msra.mxu0 %v931
          %1445 = vmatprep.subr.mxu0 0.0
          %1446 = vmatpush1.msra.mxu0 %v932
          %1447 = vmatprep.subr.mxu0 0.0
          %1448 = vmatpush1.msra.mxu0 %v933
          %1449 = vmatprep.subr.mxu0 0.0
          %1450 = vmatpush1.msra.mxu0 %v934
          %1451 = vmatprep.subr.mxu0 0.0
          %1452 = vmatpush1.msra.mxu0 %v935
          %1453 = vmatprep.subr.mxu0 0.0
          %1454 = vmatpush1.msra.mxu0 %v936
          %1455 = vmatprep.subr.mxu0 0.0
          %1456 = vmatpush1.msra.mxu0 %v937
          %1457 = vmatprep.subr.mxu0 0.0
          %1458 = vmatpush1.msra.mxu0 %v938
          %1459 = vmatprep.mubr.f32.mxu0 %v1365
          %1460 = vmatmul.mubr.f32.gmra.mrb[0].mxu0 %v1363
          %v1461 = vpop.f32.mrb[0].mxu0
          %v1462 = vadd.f32 0.0, %v1461
          %v1463 = vpop.f32.mrb[0].mxu0
          %1464 = vdwg.mxu0
          %1465 = vmatprep.subr.mxu0 0.0
          %1466 = vmatpush1.msra.mxu0 %v939
          %1467 = vmatprep.subr.mxu0 0.0
          %1468 = vmatpush1.msra.mxu0 %v940
          %1469 = vmatprep.subr.mxu0 0.0
          %1470 = vmatpush1.msra.mxu0 %v941
          %1471 = vmatprep.subr.mxu0 0.0
          %1472 = vmatpush1.msra.mxu0 %v942
          %1473 = vmatprep.subr.mxu0 0.0
          %1474 = vmatpush1.msra.mxu0 %v943
          %1475 = vmatprep.subr.mxu0 0.0
          %1476 = vmatpush1.msra.mxu0 %v944
          %1477 = vmatprep.subr.mxu0 0.0
          %1478 = vmatpush1.msra.mxu0 %v945
          %1479 = vmatprep.subr.mxu0 0.0
          %1480 = vmatpush1.msra.mxu0 %v946
          %1481 = vmatprep.subr.mxu0 0.0
          %1482 = vmatpush1.msra.mxu0 %v947
          %1483 = vmatprep.subr.mxu0 0.0
          %1484 = vmatpush1.msra.mxu0 %v948
          %1485 = vmatprep.subr.mxu0 0.0
          %1486 = vmatpush1.msra.mxu0 %v949
          %1487 = vmatprep.subr.mxu0 0.0
          %1488 = vmatpush1.msra.mxu0 %v950
          %1489 = vmatprep.subr.mxu0 0.0
          %1490 = vmatpush1.msra.mxu0 %v951
          %1491 = vmatprep.subr.mxu0 0.0
          %1492 = vmatpush1.msra.mxu0 %v952
          %1493 = vmatprep.subr.mxu0 0.0
          %1494 = vmatpush1.msra.mxu0 %v953
          %1495 = vmatprep.subr.mxu0 0.0
          %1496 = vmatpush1.msra.mxu0 %v954
          %1497 = vmatprep.subr.mxu0 0.0
          %1498 = vmatpush1.msra.mxu0 %v955
          %1499 = vmatprep.subr.mxu0 0.0
          %1500 = vmatpush1.msra.mxu0 %v956
          %1501 = vmatprep.subr.mxu0 0.0
          %1502 = vmatpush1.msra.mxu0 %v957
          %1503 = vmatprep.subr.mxu0 0.0
          %1504 = vmatpush1.msra.mxu0 %v958
          %1505 = vmatprep.subr.mxu0 0.0
          %1506 = vmatpush1.msra.mxu0 %v959
          %1507 = vmatprep.subr.mxu0 0.0
          %1508 = vmatpush1.msra.mxu0 %v960
          %1509 = vmatprep.subr.mxu0 0.0
          %1510 = vmatpush1.msra.mxu0 %v961
          %1511 = vmatprep.subr.mxu0 0.0
          %1512 = vmatpush1.msra.mxu0 %v962
          %1513 = vmatprep.subr.mxu0 0.0
          %1514 = vmatpush1.msra.mxu0 %v963
          %1515 = vmatprep.subr.mxu0 0.0
          %1516 = vmatpush1.msra.mxu0 %v964
          %1517 = vmatprep.subr.mxu0 0.0
          %1518 = vmatpush1.msra.mxu0 %v965
          %1519 = vmatprep.subr.mxu0 0.0
          %1520 = vmatpush1.msra.mxu0 %v966
          %1521 = vmatprep.subr.mxu0 0.0
          %1522 = vmatpush1.msra.mxu0 %v967
          %1523 = vmatprep.subr.mxu0 0.0
          %1524 = vmatpush1.msra.mxu0 %v968
          %1525 = vmatprep.subr.mxu0 0.0
          %1526 = vmatpush1.msra.mxu0 %v969
          %1527 = vmatprep.subr.mxu0 0.0
          %1528 = vmatpush1.msra.mxu0 %v970
          %1529 = vmatprep.mubr.f32.mxu0 %v1369
          %1530 = vmatmul.mubr.f32.gmra.mrb[0].mxu0 %v1367
          %v1531 = vpop.f32.mrb[0].mxu0
          %v1532 = vadd.f32 %v1462, %v1531
          %v1533 = vpop.f32.mrb[0].mxu0
          %1534 = vdwg.mxu0
          %v1535 = vadd.f32 %v1394, %v1532
          %vm1536 = vcmask 253952
          %1537 = vst.msk [vmem:[#allocation4] sm:$0x1] %vm1536, %v1535
          %1538 = vst.msk [vmem:[#allocation2] sm:$0x1] %vm1382, %v1345
        $region48: #{tpu_custom_call.1} parent=39 // pred_fallthru
          _
        %p1539 = scmp.eq.s32.totalorder %s32, 1
        // Predicated region
        $region49: #{tpu_custom_call.1} parent=39 // pred_check
          %p1540 = pneg %p1539
        $region50: #{tpu_custom_call.1} parent=39 // pred_check_branch
          %1542 = sbr.rel (%p1540) target = $region52
        $region51: #{tpu_custom_call.1} parent=39 // pred_region
          %v1543 = vld [vmem:[#allocation3] sm:$0x1]
          %v1544 = vmax.f32 %v1543, 1e-30
          %v1545 = vld [vmem:[#allocation4] sm:$0x1]
          %1547 = vset.pattern.permute.xlu0 0
          %1548 = vperm.xlu0 %1547, %v1544
          %v1549 = vpop.permute.xlu0 %1548
          %v1551 = vlaneseq
          %v1552 = vshrl.u32 %v1551, 7
          %v1553 = vsub.s32 0, %v1552
          %v1554 = vrot.slane %v1549, %v1553
          %v1555 = vrcp.pop %v1554
          %v1556 = vmul.f32 %v1545, %v1555
          %vm1557 = vcmask 253952
          %1558 = vst.msk [vmem:[%s247] sm:$0x1] %vm1557, %v1556
        $region52: #{tpu_custom_call.1} parent=39 // pred_fallthru
          _
        %s1559 = sand.u32 %s159, 1
        %s1560 = scalar_lea.sflag [#allocation9], %s1559
        %s1561 = sand.u32 %s159, 1
        %s1562 = scalar_lea.vmem [#allocation8], %s1561
        // Predicated region
        $region53: #{tpu_custom_call.1} parent=39 // pred_check
          %p1563 = pneg %p169
        $region54: #{tpu_custom_call.1} parent=39 // pred_check_branch
          %1565 = sbr.rel (%p1563) target = $region56
        $region55: #{tpu_custom_call.1} parent=39 // pred_region
          %s1567 = ssub.s32 16, 16
          %1568 = vsyncadd %s1560, %s1567
          %s1569 = smul.addr %s31, 16
          %s1570 = scalar_lea.hbm %s6, %s1569
          %s1572 = sshll.u32 %s1562, 4
          %s1573 = int_to_ptr.vmem [resolvable:$true] %s1572
          %1575 = dma.vmem_to_hbm [thread:$0]  %s1573, 16, %s1570, %s1560
        $region56: #{tpu_custom_call.1} parent=39 // pred_fallthru
          _
      $region40: #{tpu_custom_call.1} parent=5 // pred_fallthru
        _
      %p1576 = scmp.le.s32.totalorder 2, %s22
      // Predicated region
      $region57: #{tpu_custom_call.1} parent=5 // pred_check
        %p1577 = pneg %p1576
      $region58: #{tpu_custom_call.1} parent=5 // pred_check_branch
        %1579 = sbr.rel (%p1577) target = $region60
      $region59: #{tpu_custom_call.1} parent=5 // pred_region
        %s1580 = ssub.s32 %s22, 2
        // Predicated region
        $region61: #{tpu_custom_call.1} parent=59 // pred_check
          %p1581 = pneg %p175
        $region62: #{tpu_custom_call.1} parent=59 // pred_check_branch
          %1583 = sbr.rel (%p1581) target = $region64
        $region63: #{tpu_custom_call.1} parent=59 // pred_region
          %s1584 = sand.u32 %s160, 1
          %s1585 = scalar_lea.sflag [#allocation9], %s1584
          %s1586 = sand.u32 %s160, 1
          %s1587 = scalar_lea.vmem [#allocation8], %s1586
          %1588 = dma.done %s1585, 16
        $region64: #{tpu_custom_call.1} parent=59 // pred_fallthru
          _
      $region60: #{tpu_custom_call.1} parent=5 // pred_fallthru
        _
    $region6: #{tpu_custom_call.1} parent=1 // loop_footer
      %s26 = sadd.s32 1, %s22
    $region7: #{tpu_custom_call.1} parent=1 // loop_footer_branch
      %21 = sbr.rel target = $region3
    $region8: #{tpu_custom_call.1} parent=1 // loop_exit
      _
    %1589 = vsyncpa [#allocation9], 1
    %s1590 = scalar_lea.sflag [#allocation9], 1
    %1591 = vsyncpa %s1590, 1

</llo_original>
